<compile_context>
chip_gen: v6e
topology: v6e:2x2x1
jax: 0.10.0
libtpu: 0.0.40
codegen_flags: <defaults>
</compile_context>

<pallas_src>
import jax
import jax.numpy as jnp
from jax.experimental import pallas as pl
from jax.experimental.pallas import tpu as pltpu

K_IN = 28 * 28      # 784 input features (left unpadded in HBM)
H1 = 512
H2 = 256
OUT_PAD = 128       # w3 padded 1 -> 128 cols once, in prepare_params (tiny, VMEM-resident)


def _discriminator_kernel(x_ref, w1_ref, b1_ref, w2_ref, b2_ref,
                          w3_ref, b3_ref, o_ref):
    # Layer 1: (tile_b, 784) @ (784, 512) — bf16 MXU inputs, f32 accumulate.
    x = x_ref[...].astype(jnp.bfloat16)
    h1 = jnp.dot(x, w1_ref[...], preferred_element_type=jnp.float32)
    h1 = h1 + b1_ref[...]
    h1 = jnp.maximum(h1, 0.2 * h1)            # LeakyReLU(0.2), single VALU max

    # Layer 2: (tile_b, 512) @ (512, 256)
    h2 = jnp.dot(h1.astype(jnp.bfloat16), w2_ref[...],
                 preferred_element_type=jnp.float32)
    h2 = h2 + b2_ref[...]
    h2 = jnp.maximum(h2, 0.2 * h2)

    # Layer 3: (tile_b, 256) @ (256, 128) lane-aligned RHS; only column 0 is real.
    h3 = jnp.dot(h2.astype(jnp.bfloat16), w3_ref[...],
                 preferred_element_type=jnp.float32)
    logit = h3[:, 0:1] + b3_ref[...]          # (tile_b, 1)

    # Numerically stable sigmoid on the EUP: sigmoid(x) = 0.5*(tanh(x/2)+1).
    o_ref[...] = 0.5 * (jnp.tanh(0.5 * logit) + 1.0)


def _round_up(n, m):
    return ((n + m - 1) // m) * m


def _pick_tile_b(batch, tile_b_max=1024):
    """Rows per grid step.

    * multiple of 16 (bf16 sublane packing),
    * capped at `tile_b_max` (~12 MiB live VMEM at 1024 rows),
    * batches big enough to matter get >= 2 tiles so both v7x TensorCores
      receive work under dimension_semantics=("parallel",).
    """
    b16 = _round_up(max(batch, 1), 16)
    if b16 <= 256:                   # tiny batch: splitting only adds step overhead
        return b16
    half = _round_up(-(-b16 // 2), 16)
    return min(tile_b_max, half)


def prepare_params(params):
    """One-time parameter prep (hoisted out of the per-call path): bf16 weight
    casts for the MXU, f32 biases, and the 1->128 column padding of w3 so the
    final matmul has a lane-aligned RHS."""
    w1, b1, w2, b2, w3, b3 = params
    w1_b = jnp.asarray(w1, jnp.bfloat16)                        # (784, 512)
    w2_b = jnp.asarray(w2, jnp.bfloat16)                        # (512, 256)
    w3_p = (jnp.zeros((H2, OUT_PAD), jnp.bfloat16)
            .at[:, :1].set(jnp.asarray(w3, jnp.bfloat16)))      # (256, 128)
    b1_f = jnp.asarray(b1, jnp.float32).reshape(1, H1)
    b2_f = jnp.asarray(b2, jnp.float32).reshape(1, H2)
    b3_f = jnp.asarray(b3, jnp.float32).reshape(1, 1)
    return (w1_b, b1_f, w2_b, b2_f, w3_p, b3_f)


def discriminator_forward(img, prepped_params, *, tile_b=None):
    """img: (B, 1, 28, 28) float32 NCHW (like the torch module).
    prepped_params: output of `prepare_params`.  Returns validity (B, 1) f32."""
    w1, b1, w2, b2, w3p, b3 = prepped_params
    B = img.shape[0]
    x = img.reshape(B, K_IN).astype(jnp.float32)    # (B, 784); same as torch .view

    if tile_b is None:
        tile_b = _pick_tile_b(B)
    else:
        tile_b = _round_up(tile_b, 16)
    b_pad = _round_up(B, tile_b)
    if b_pad != B:                                   # only pads the ragged last tile
        x = jnp.pad(x, ((0, b_pad - B), (0, 0)))

    grid = (b_pad // tile_b,)

    def resident(shape):
        # Same block index every grid step -> stays VMEM-resident, no re-DMA.
        return pl.BlockSpec(shape, lambda i: (0, 0))

    out = pl.pallas_call(
        _discriminator_kernel,
        out_shape=jax.ShapeDtypeStruct((b_pad, 1), jnp.float32),
        grid=grid,
        in_specs=[
            pl.BlockSpec((tile_b, K_IN), lambda i: (i, 0)),   # x: batch-tiled
            resident((K_IN, H1)), resident((1, H1)),
            resident((H1, H2)),   resident((1, H2)),
            resident((H2, OUT_PAD)), resident((1, 1)),
        ],
        out_specs=pl.BlockSpec((tile_b, 1), lambda i: (i, 0)),
        compiler_params=pltpu.CompilerParams(
            dimension_semantics=("parallel",),       # megacore sharding on v7x
            vmem_limit_bytes=32 * 1024 * 1024,
        ),
    )(x, w1, b1, w2, b2, w3p, b3)

    return out[:B]     # strip batch padding; output already has a single column


def init_params(key):
    """Deterministic synthetic parameters matching the module's shapes.
    Weights are (in_features, out_features) so the kernel computes x @ W + b
    (equivalent to torch's x @ W_t.T + b)."""
    k1, k2, k3, k4, k5, k6 = jax.random.split(key, 6)
    w1 = jax.random.normal(k1, (K_IN, H1), jnp.float32) * 0.02
    b1 = jax.random.normal(k2, (1, H1), jnp.float32) * 0.02
    w2 = jax.random.normal(k3, (H1, H2), jnp.float32) * 0.02
    b2 = jax.random.normal(k4, (1, H2), jnp.float32) * 0.02
    w3 = jax.random.normal(k5, (H2, 1), jnp.float32) * 0.02
    b3 = jax.random.normal(k6, (1, 1), jnp.float32) * 0.02
    return (w1, b1, w2, b2, w3, b3)


def _reference_forward(img, params):
    w1, b1, w2, b2, w3, b3 = params
    x = img.reshape(img.shape[0], -1)
    h = x @ w1 + b1
    h = jnp.where(h > 0, h, 0.2 * h)
    h = h @ w2 + b2
    h = jnp.where(h > 0, h, 0.2 * h)
    h = h @ w3 + b3
    return jax.nn.sigmoid(h)


if __name__ == "__main__":
    key = jax.random.PRNGKey(0)
    k_img, k_par, k_img2 = jax.random.split(key, 3)

    params = init_params(k_par)
    prepped = prepare_params(params)    # one-time prep, reused across calls

    # Case 1: tiny batch (single tile), like the module's typical usage.
    B = 2
    img = jax.random.normal(k_img, (B, 1, 28, 28), jnp.float32)   # NCHW like torch
    out = jax.block_until_ready(discriminator_forward(img, prepped))
    ref = _reference_forward(img, params)
    assert out.shape == (B, 1)
    assert jnp.allclose(out, ref, atol=2e-2, rtol=0.0), "mismatch vs JAX reference (B=2)"

    # Case 2: non-multiple batch with a small forced tile -> multi-step grid;
    # exercises batch padding, VMEM-resident weights and the parallel batch axis.
    B2 = 50
    img2 = jax.random.normal(k_img2, (B2, 1, 28, 28), jnp.float32)
    out2 = jax.block_until_ready(discriminator_forward(img2, prepped, tile_b=16))
    ref2 = _reference_forward(img2, params)
    assert out2.shape == (B2, 1)
    assert jnp.allclose(out2, ref2, atol=2e-2, rtol=0.0), "mismatch vs JAX reference (B=50)"

    print("KERNEL_OK")
</pallas_src>

<mosaic_0001>
module attributes {stable_mosaic.version = 11 : i64} {
  func.func @_discriminator_kernel(%arg0: i32, %arg1: memref<16x784xf32, #tpu.memory_space<vmem>>, %arg2: memref<784x512xbf16, #tpu.memory_space<vmem>>, %arg3: memref<1x512xf32, #tpu.memory_space<vmem>>, %arg4: memref<512x256xbf16, #tpu.memory_space<vmem>>, %arg5: memref<1x256xf32, #tpu.memory_space<vmem>>, %arg6: memref<256x128xbf16, #tpu.memory_space<vmem>>, %arg7: memref<1x1xf32, #tpu.memory_space<vmem>>, %arg8: memref<16x1xf32, #tpu.memory_space<vmem>>) attributes {dimension_semantics = [#tpu.dimension_semantics<parallel>], iteration_bounds = array<i64: 1>, scalar_prefetch = 0 : i64, scratch_operands = 0 : i64, tpu.core_type = #tpu.core_type<tc>, window_params = [{transform_indices = @transform_0, window_bounds = array<i64: 16, 784>}, {pipeline_mode = #tpu.pipeline_mode<synchronous>, transform_indices = @transform_1, window_bounds = array<i64: 784, 512>}, {pipeline_mode = #tpu.pipeline_mode<synchronous>, transform_indices = @transform_2, window_bounds = array<i64: 1, 512>}, {pipeline_mode = #tpu.pipeline_mode<synchronous>, transform_indices = @transform_3, window_bounds = array<i64: 512, 256>}, {pipeline_mode = #tpu.pipeline_mode<synchronous>, transform_indices = @transform_4, window_bounds = array<i64: 1, 256>}, {pipeline_mode = #tpu.pipeline_mode<synchronous>, transform_indices = @transform_5, window_bounds = array<i64: 256, 128>}, {pipeline_mode = #tpu.pipeline_mode<synchronous>, transform_indices = @transform_6, window_bounds = array<i64: 1, 1>}, {transform_indices = @transform_7, window_bounds = array<i64: 16, 1>}]} {
    %c0 = arith.constant 0 : index
    %c0_0 = arith.constant 0 : index
    %0 = vector.load %arg1[%c0, %c0_0] : memref<16x784xf32, #tpu.memory_space<vmem>>, vector<16x784xf32>
    %1 = arith.truncf %0 : vector<16x784xf32> to vector<16x784xbf16>
    %c0_1 = arith.constant 0 : index
    %c0_2 = arith.constant 0 : index
    %2 = vector.load %arg2[%c0_1, %c0_2] : memref<784x512xbf16, #tpu.memory_space<vmem>>, vector<784x512xbf16>
    %cst = arith.constant dense<0.000000e+00> : vector<16x512xf32>
    %3 = tpu.matmul %1, %2, %cst {dimension_numbers = #tpu.dot_dimension_numbers<[1], [0], [0], [1], [0, 0, 1, 1], [], []>} : vector<16x784xbf16>, vector<784x512xbf16>, vector<16x512xf32> -> vector<16x512xf32>
    %c0_3 = arith.constant 0 : index
    %c0_4 = arith.constant 0 : index
    %4 = vector.load %arg3[%c0_3, %c0_4] : memref<1x512xf32, #tpu.memory_space<vmem>>, vector<1x512xf32>
    %5 = vector.broadcast %4 : vector<1x512xf32> to vector<16x512xf32>
    %6 = arith.addf %3, %5 : vector<16x512xf32>
    %cst_5 = arith.constant 2.000000e-01 : f32
    %7 = vector.broadcast %cst_5 : f32 to vector<16x512xf32>
    %8 = arith.mulf %7, %6 : vector<16x512xf32>
    %9 = arith.maximumf %6, %8 : vector<16x512xf32>
    %10 = arith.truncf %9 : vector<16x512xf32> to vector<16x512xbf16>
    %c0_6 = arith.constant 0 : index
    %c0_7 = arith.constant 0 : index
    %11 = vector.load %arg4[%c0_6, %c0_7] : memref<512x256xbf16, #tpu.memory_space<vmem>>, vector<512x256xbf16>
    %cst_8 = arith.constant dense<0.000000e+00> : vector<16x256xf32>
    %12 = tpu.matmul %10, %11, %cst_8 {dimension_numbers = #tpu.dot_dimension_numbers<[1], [0], [0], [1], [0, 0, 1, 1], [], []>} : vector<16x512xbf16>, vector<512x256xbf16>, vector<16x256xf32> -> vector<16x256xf32>
    %c0_9 = arith.constant 0 : index
    %c0_10 = arith.constant 0 : index
    %13 = vector.load %arg5[%c0_9, %c0_10] : memref<1x256xf32, #tpu.memory_space<vmem>>, vector<1x256xf32>
    %14 = vector.broadcast %13 : vector<1x256xf32> to vector<16x256xf32>
    %15 = arith.addf %12, %14 : vector<16x256xf32>
    %cst_11 = arith.constant 2.000000e-01 : f32
    %16 = vector.broadcast %cst_11 : f32 to vector<16x256xf32>
    %17 = arith.mulf %16, %15 : vector<16x256xf32>
    %18 = arith.maximumf %15, %17 : vector<16x256xf32>
    %19 = arith.truncf %18 : vector<16x256xf32> to vector<16x256xbf16>
    %c0_12 = arith.constant 0 : index
    %c0_13 = arith.constant 0 : index
    %20 = vector.load %arg6[%c0_12, %c0_13] : memref<256x128xbf16, #tpu.memory_space<vmem>>, vector<256x128xbf16>
    %cst_14 = arith.constant dense<0.000000e+00> : vector<16x128xf32>
    %21 = tpu.matmul %19, %20, %cst_14 {dimension_numbers = #tpu.dot_dimension_numbers<[1], [0], [0], [1], [0, 0, 1, 1], [], []>} : vector<16x256xbf16>, vector<256x128xbf16>, vector<16x128xf32> -> vector<16x128xf32>
    %22 = vector.extract_strided_slice %21 {offsets = [0, 0], sizes = [16, 1], strides = [1, 1]} : vector<16x128xf32> to vector<16x1xf32>
    %c0_15 = arith.constant 0 : index
    %c0_16 = arith.constant 0 : index
    %23 = vector.load %arg7[%c0_15, %c0_16] : memref<1x1xf32, #tpu.memory_space<vmem>>, vector<1x1xf32>
    %24 = vector.broadcast %23 : vector<1x1xf32> to vector<16x1xf32>
    %25 = arith.addf %22, %24 : vector<16x1xf32>
    %cst_17 = arith.constant 5.000000e-01 : f32
    %26 = vector.broadcast %cst_17 : f32 to vector<16x1xf32>
    %27 = arith.mulf %26, %25 : vector<16x1xf32>
    %28 = math.tanh %27 : vector<16x1xf32>
    %cst_18 = arith.constant 1.000000e+00 : f32
    %29 = vector.broadcast %cst_18 : f32 to vector<16x1xf32>
    %30 = arith.addf %28, %29 : vector<16x1xf32>
    %cst_19 = arith.constant 5.000000e-01 : f32
    %31 = vector.broadcast %cst_19 : f32 to vector<16x1xf32>
    %32 = arith.mulf %31, %30 : vector<16x1xf32>
    %c0_20 = arith.constant 0 : index
    %c0_21 = arith.constant 0 : index
    %33 = vector.load %arg8[%c0_20, %c0_21] : memref<16x1xf32, #tpu.memory_space<vmem>>, vector<16x1xf32>
    tpu.vector_store %arg8[%c0_20, %c0_21], %32 {strides = array<i32>} : memref<16x1xf32, #tpu.memory_space<vmem>>, vector<16x1xf32>,
    return
  }
  func.func @transform_0(%arg0: i32) -> (i32, i32) {
    %c0_i32 = arith.constant 0 : i32
    %c0_i32_0 = arith.constant 0 : i32
    return %arg0, %c0_i32 : i32, i32
  }
  func.func @transform_1(%arg0: i32) -> (i32, i32) {
    %c0_i32 = arith.constant 0 : i32
    %c0_i32_0 = arith.constant 0 : i32
    %c0_i32_1 = arith.constant 0 : i32
    return %c0_i32, %c0_i32_0 : i32, i32
  }
  func.func @transform_2(%arg0: i32) -> (i32, i32) {
    %c0_i32 = arith.constant 0 : i32
    %c0_i32_0 = arith.constant 0 : i32
    %c0_i32_1 = arith.constant 0 : i32
    return %c0_i32, %c0_i32_0 : i32, i32
  }
  func.func @transform_3(%arg0: i32) -> (i32, i32) {
    %c0_i32 = arith.constant 0 : i32
    %c0_i32_0 = arith.constant 0 : i32
    %c0_i32_1 = arith.constant 0 : i32
    return %c0_i32, %c0_i32_0 : i32, i32
  }
  func.func @transform_4(%arg0: i32) -> (i32, i32) {
    %c0_i32 = arith.constant 0 : i32
    %c0_i32_0 = arith.constant 0 : i32
    %c0_i32_1 = arith.constant 0 : i32
    return %c0_i32, %c0_i32_0 : i32, i32
  }
  func.func @transform_5(%arg0: i32) -> (i32, i32) {
    %c0_i32 = arith.constant 0 : i32
    %c0_i32_0 = arith.constant 0 : i32
    %c0_i32_1 = arith.constant 0 : i32
    return %c0_i32, %c0_i32_0 : i32, i32
  }
  func.func @transform_6(%arg0: i32) -> (i32, i32) {
    %c0_i32 = arith.constant 0 : i32
    %c0_i32_0 = arith.constant 0 : i32
    %c0_i32_1 = arith.constant 0 : i32
    return %c0_i32, %c0_i32_0 : i32, i32
  }
  func.func @transform_7(%arg0: i32) -> (i32, i32) {
    %c0_i32 = arith.constant 0 : i32
    %c0_i32_0 = arith.constant 0 : i32
    return %arg0, %c0_i32 : i32, i32
  }
}

</mosaic_0001>

<llo_original>
// kernel: tpu_custom_call.1
$region0: #{tpu_custom_call.1}
  #allocation0 [shape = 'u32[]', space=smem, size = 0x4, offset = 0x4, fixed_abs, tag = 'smem constant byte address 0x4 - core index']
  #allocation1 [shape = 'u32[144,128]{1,0:T(1,128)}', space=vmem, size = 0x12000, scoped, tag = 'internal scratch']
  #allocation2 [shape = 'f32[1,1]{1,0:T(1,128)S(1)}', space=vmem, size = 0x200, scoped, tag = 'scoped memory for tpu_custom_call.1']
  %s0 = inlined_call_operand.hbm [shape: f32[16,784], index: 0, kind: input, shape index: {}]
  %s1 = inlined_call_operand.hbm [shape: bf16[784,512], index: 1, kind: input, shape index: {}]
  %s2 = inlined_call_operand.vmem [shape: f32[1,512], index: 2, kind: input, shape index: {}]
  %s3 = inlined_call_operand.hbm [shape: bf16[512,256], index: 3, kind: input, shape index: {}]
  %s4 = inlined_call_operand.vmem [shape: f32[1,256], index: 4, kind: input, shape index: {}]
  %s5 = inlined_call_operand.hbm [shape: bf16[256,128], index: 5, kind: input, shape index: {}]
  %s6 = inlined_call_operand.<no memory space> [shape: f32[1,1], index: 6, kind: input, shape index: {}]
  %s7 = inlined_call_operand.vmem [shape: f32[16,1], index: 7, kind: output, shape index: {}]
  %s8 = sld [smem:[#allocation0]]
  $region54: #{tpu_custom_call.1} parent=0
    _
  %s10 = ssub.s32 1, %s8
  %s11 = scalar_select 0, %s10, %s8
  %v12 = vstv %s6
  %13 = vst [vmem:[#allocation2] sm:$0x1] %v12
  $region1: #{tpu_custom_call.1} parent=0
    #allocation3 [shape = 'u8[57344]{0}', space=vmem, size = 0xe000, scoped, tag = 'input window, operand 0, single buffered']
    #allocation4 [shape = 's32[1]{0}', space=sflag, size = 0x4, scoped, tag = 'scoped memory for tpu_custom_call.1']
    #allocation5 [shape = 'u8[802816]{0}', space=vmem, size = 0xc4000, scoped, tag = 'input window, operand 1, single buffered']
    #allocation6 [shape = 's32[1]{0}', space=sflag, size = 0x4, scoped, tag = 'scoped memory for tpu_custom_call.1']
    #allocation7 [shape = 'u8[262144]{0}', space=vmem, size = 0x40000, scoped, tag = 'input window, operand 3, single buffered']
    #allocation8 [shape = 'u8[65536]{0}', space=vmem, size = 0x10000, scoped, tag = 'input window, operand 5, single buffered']
    #allocation9 [shape = 's32[1]{0}', space=sflag, size = 0x4, scoped, tag = 'scoped memory for tpu_custom_call.1']
    %14 = vsyncpa [#allocation4], 0
    %15 = vsyncpa [#allocation6], 0
    %16 = vsyncpa [#allocation9], 0
    // Predicated region
    $region2: #{tpu_custom_call.1} parent=1 // pred_check
      _
    $region3: #{tpu_custom_call.1} parent=1 // pred_check_branch
      %18 = sbr.rel (0) target = $region5
    $region4: #{tpu_custom_call.1} parent=1 // pred_region
      %s20 = ssub.s32 1792, 1792
      %21 = vsyncadd [#allocation4], %s20
      %s22 = sshll.u32 [#allocation3], 4
      %s23 = int_to_ptr.vmem [resolvable:$true] %s22
      %28 = dma.hbm_to_vmem [thread:$0]  %s0, 1792, %s23, [#allocation4], 896, 896, 56
    $region5: #{tpu_custom_call.1} parent=1 // pred_fallthru
      _
    // Predicated region
    $region6: #{tpu_custom_call.1} parent=1 // pred_check
      _
    $region7: #{tpu_custom_call.1} parent=1 // pred_check_branch
      %30 = sbr.rel (0) target = $region9
    $region8: #{tpu_custom_call.1} parent=1 // pred_region
      %s32 = ssub.s32 25088, 25088
      %33 = vsyncadd [#allocation6], %s32
      %s34 = sshll.u32 [#allocation5], 4
      %s35 = int_to_ptr.vmem [resolvable:$true] %s34
      %40 = dma.hbm_to_vmem [thread:$0]  %s1, 25088, %s35, [#allocation6], 256, 256, 16
    $region9: #{tpu_custom_call.1} parent=1 // pred_fallthru
      _
    // Predicated region
    $region10: #{tpu_custom_call.1} parent=1 // pred_check
      _
    $region11: #{tpu_custom_call.1} parent=1 // pred_check_branch
      %42 = sbr.rel (0) target = $region13
    $region12: #{tpu_custom_call.1} parent=1 // pred_region
      _
    $region13: #{tpu_custom_call.1} parent=1 // pred_fallthru
      _
    // Predicated region
    $region14: #{tpu_custom_call.1} parent=1 // pred_check
      _
    $region15: #{tpu_custom_call.1} parent=1 // pred_check_branch
      %44 = sbr.rel (0) target = $region17
    $region16: #{tpu_custom_call.1} parent=1 // pred_region
      %s46 = ssub.s32 8192, 8192
      %47 = vsyncadd [#allocation6], %s46
      %s48 = sshll.u32 [#allocation7], 4
      %s49 = int_to_ptr.vmem [resolvable:$true] %s48
      %54 = dma.hbm_to_vmem [thread:$0]  %s3, 8192, %s49, [#allocation6], 128, 128, 8
    $region17: #{tpu_custom_call.1} parent=1 // pred_fallthru
      _
    // Predicated region
    $region18: #{tpu_custom_call.1} parent=1 // pred_check
      _
    $region19: #{tpu_custom_call.1} parent=1 // pred_check_branch
      %56 = sbr.rel (0) target = $region21
    $region20: #{tpu_custom_call.1} parent=1 // pred_region
      _
    $region21: #{tpu_custom_call.1} parent=1 // pred_fallthru
      _
    // Predicated region
    $region22: #{tpu_custom_call.1} parent=1 // pred_check
      _
    $region23: #{tpu_custom_call.1} parent=1 // pred_check_branch
      %58 = sbr.rel (0) target = $region25
    $region24: #{tpu_custom_call.1} parent=1 // pred_region
      %s60 = ssub.s32 2048, 2048
      %61 = vsyncadd [#allocation9], %s60
      %s62 = sshll.u32 [#allocation8], 4
      %s63 = int_to_ptr.vmem [resolvable:$true] %s62
      %68 = dma.hbm_to_vmem [thread:$0]  %s5, 2048, %s63, [#allocation9], 64, 64, 4
    $region25: #{tpu_custom_call.1} parent=1 // pred_fallthru
      _
    // Predicated region
    $region26: #{tpu_custom_call.1} parent=1 // pred_check
      _
    $region27: #{tpu_custom_call.1} parent=1 // pred_check_branch
      %70 = sbr.rel (0) target = $region29
    $region28: #{tpu_custom_call.1} parent=1 // pred_region
      _
    $region29: #{tpu_custom_call.1} parent=1 // pred_fallthru
      _
    // Predicated region
    $region30: #{tpu_custom_call.1} parent=1 // pred_check
      _
    $region31: #{tpu_custom_call.1} parent=1 // pred_check_branch
      %72 = sbr.rel (0) target = $region33
    $region32: #{tpu_custom_call.1} parent=1 // pred_region
      %73 = dma.done [#allocation4], 1792
    $region33: #{tpu_custom_call.1} parent=1 // pred_fallthru
      _
    // Predicated region
    $region34: #{tpu_custom_call.1} parent=1 // pred_check
      _
    $region35: #{tpu_custom_call.1} parent=1 // pred_check_branch
      %75 = sbr.rel (0) target = $region37
    $region36: #{tpu_custom_call.1} parent=1 // pred_region
      %76 = dma.done [#allocation6], 25088
    $region37: #{tpu_custom_call.1} parent=1 // pred_fallthru
      _
    // Predicated region
    $region38: #{tpu_custom_call.1} parent=1 // pred_check
      _
    $region39: #{tpu_custom_call.1} parent=1 // pred_check_branch
      %78 = sbr.rel (0) target = $region41
    $region40: #{tpu_custom_call.1} parent=1 // pred_region
      %79 = dma.done [#allocation6], 8192
    $region41: #{tpu_custom_call.1} parent=1 // pred_fallthru
      _
    // Predicated region
    $region42: #{tpu_custom_call.1} parent=1 // pred_check
      _
    $region43: #{tpu_custom_call.1} parent=1 // pred_check_branch
      %81 = sbr.rel (0) target = $region45
    $region44: #{tpu_custom_call.1} parent=1 // pred_region
      %82 = dma.done [#allocation9], 2048
    $region45: #{tpu_custom_call.1} parent=1 // pred_fallthru
      _
    %v84 = vld [vmem:[#allocation3] sm:$0xff]
    %v85 = vld [vmem:[#allocation3 + $0x8] sm:$0xff]
    %v86 = vld [vmem:[#allocation3 + $0x10] sm:$0xff]
    %v87 = vld [vmem:[#allocation3 + $0x18] sm:$0xff]
    %v88 = vld [vmem:[#allocation3 + $0x20] sm:$0xff]
    %v89 = vld [vmem:[#allocation3 + $0x28] sm:$0xff]
    %v90 = vld [vmem:[#allocation3 + $0x30] sm:$0xff]
    %v91 = vld [vmem:[#allocation3 + $0x38] sm:$0xff]
    %v92 = vld [vmem:[#allocation3 + $0x40] sm:$0xff]
    %v93 = vld [vmem:[#allocation3 + $0x48] sm:$0xff]
    %v94 = vld [vmem:[#allocation3 + $0x50] sm:$0xff]
    %v95 = vld [vmem:[#allocation3 + $0x58] sm:$0xff]
    %v96 = vld [vmem:[#allocation3 + $0x60] sm:$0xff]
    %v97 = vld [vmem:[#allocation3 + $0x68] sm:$0xff]
    %v98 = vpack.c.bf16 %v91, %v84
    %v99 = vpack.c.bf16 %v92, %v85
    %v100 = vpack.c.bf16 %v93, %v86
    %v101 = vpack.c.bf16 %v94, %v87
    %v102 = vpack.c.bf16 %v95, %v88
    %v103 = vpack.c.bf16 %v96, %v89
    %v104 = vpack.c.bf16 %v97, %v90
    %v105 = vld [vmem:[#allocation5] sm:$0xff]
    %v106 = vld [vmem:[#allocation5 + $0x8] sm:$0xff]
    %v107 = vld [vmem:[#allocation5 + $0x10] sm:$0xff]
    %v108 = vld [vmem:[#allocation5 + $0x18] sm:$0xff]
    %v109 = vld [vmem:[#allocation5 + $0x20] sm:$0xff]
    %v110 = vld [vmem:[#allocation5 + $0x28] sm:$0xff]
    %v111 = vld [vmem:[#allocation5 + $0x30] sm:$0xff]
    %v112 = vld [vmem:[#allocation5 + $0x38] sm:$0xff]
    %v113 = vld [vmem:[#allocation5 + $0x40] sm:$0xff]
    %v114 = vld [vmem:[#allocation5 + $0x48] sm:$0xff]
    %v115 = vld [vmem:[#allocation5 + $0x50] sm:$0xff]
    %v116 = vld [vmem:[#allocation5 + $0x58] sm:$0xff]
    %v117 = vld [vmem:[#allocation5 + $0x60] sm:$0xff]
    %v118 = vld [vmem:[#allocation5 + $0x68] sm:$0xff]
    %v119 = vld [vmem:[#allocation5 + $0x70] sm:$0xff]
    %v120 = vld [vmem:[#allocation5 + $0x78] sm:$0xff]
    %v121 = vld [vmem:[#allocation5 + $0x80] sm:$0xff]
    %v122 = vld [vmem:[#allocation5 + $0x88] sm:$0xff]
    %v123 = vld [vmem:[#allocation5 + $0x90] sm:$0xff]
    %v124 = vld [vmem:[#allocation5 + $0x98] sm:$0xff]
    %v125 = vld [vmem:[#allocation5 + $0xa0] sm:$0xff]
    %v126 = vld [vmem:[#allocation5 + $0xa8] sm:$0xff]
    %v127 = vld [vmem:[#allocation5 + $0xb0] sm:$0xff]
    %v128 = vld [vmem:[#allocation5 + $0xb8] sm:$0xff]
    %v129 = vld [vmem:[#allocation5 + $0xc0] sm:$0xff]
    %v130 = vld [vmem:[#allocation5 + $0xc8] sm:$0xff]
    %v131 = vld [vmem:[#allocation5 + $0xd0] sm:$0xff]
    %v132 = vld [vmem:[#allocation5 + $0xd8] sm:$0xff]
    %v133 = vld [vmem:[#allocation5 + $0xe0] sm:$0xff]
    %v134 = vld [vmem:[#allocation5 + $0xe8] sm:$0xff]
    %v135 = vld [vmem:[#allocation5 + $0xf0] sm:$0xff]
    %v136 = vld [vmem:[#allocation5 + $0xf8] sm:$0xff]
    %v137 = vld [vmem:[#allocation5 + $0x100] sm:$0xff]
    %v138 = vld [vmem:[#allocation5 + $0x108] sm:$0xff]
    %v139 = vld [vmem:[#allocation5 + $0x110] sm:$0xff]
    %v140 = vld [vmem:[#allocation5 + $0x118] sm:$0xff]
    %v141 = vld [vmem:[#allocation5 + $0x120] sm:$0xff]
    %v142 = vld [vmem:[#allocation5 + $0x128] sm:$0xff]
    %v143 = vld [vmem:[#allocation5 + $0x130] sm:$0xff]
    %v144 = vld [vmem:[#allocation5 + $0x138] sm:$0xff]
    %v145 = vld [vmem:[#allocation5 + $0x140] sm:$0xff]
    %v146 = vld [vmem:[#allocation5 + $0x148] sm:$0xff]
    %v147 = vld [vmem:[#allocation5 + $0x150] sm:$0xff]
    %v148 = vld [vmem:[#allocation5 + $0x158] sm:$0xff]
    %v149 = vld [vmem:[#allocation5 + $0x160] sm:$0xff]
    %v150 = vld [vmem:[#allocation5 + $0x168] sm:$0xff]
    %v151 = vld [vmem:[#allocation5 + $0x170] sm:$0xff]
    %v152 = vld [vmem:[#allocation5 + $0x178] sm:$0xff]
    %v153 = vld [vmem:[#allocation5 + $0x180] sm:$0xff]
    %v154 = vld [vmem:[#allocation5 + $0x188] sm:$0xff]
    %v155 = vld [vmem:[#allocation5 + $0x190] sm:$0xff]
    %v156 = vld [vmem:[#allocation5 + $0x198] sm:$0xff]
    %v157 = vld [vmem:[#allocation5 + $0x1a0] sm:$0xff]
    %v158 = vld [vmem:[#allocation5 + $0x1a8] sm:$0xff]
    %v159 = vld [vmem:[#allocation5 + $0x1b0] sm:$0xff]
    %v160 = vld [vmem:[#allocation5 + $0x1b8] sm:$0xff]
    %v161 = vld [vmem:[#allocation5 + $0x1c0] sm:$0xff]
    %v162 = vld [vmem:[#allocation5 + $0x1c8] sm:$0xff]
    %v163 = vld [vmem:[#allocation5 + $0x1d0] sm:$0xff]
    %v164 = vld [vmem:[#allocation5 + $0x1d8] sm:$0xff]
    %v165 = vld [vmem:[#allocation5 + $0x1e0] sm:$0xff]
    %v166 = vld [vmem:[#allocation5 + $0x1e8] sm:$0xff]
    %v167 = vld [vmem:[#allocation5 + $0x1f0] sm:$0xff]
    %v168 = vld [vmem:[#allocation5 + $0x1f8] sm:$0xff]
    %v169 = vld [vmem:[#allocation5 + $0x200] sm:$0xff]
    %v170 = vld [vmem:[#allocation5 + $0x208] sm:$0xff]
    %v171 = vld [vmem:[#allocation5 + $0x210] sm:$0xff]
    %v172 = vld [vmem:[#allocation5 + $0x218] sm:$0xff]
    %v173 = vld [vmem:[#allocation5 + $0x220] sm:$0xff]
    %v174 = vld [vmem:[#allocation5 + $0x228] sm:$0xff]
    %v175 = vld [vmem:[#allocation5 + $0x230] sm:$0xff]
    %v176 = vld [vmem:[#allocation5 + $0x238] sm:$0xff]
    %v177 = vld [vmem:[#allocation5 + $0x240] sm:$0xff]
    %v178 = vld [vmem:[#allocation5 + $0x248] sm:$0xff]
    %v179 = vld [vmem:[#allocation5 + $0x250] sm:$0xff]
    %v180 = vld [vmem:[#allocation5 + $0x258] sm:$0xff]
    %v181 = vld [vmem:[#allocation5 + $0x260] sm:$0xff]
    %v182 = vld [vmem:[#allocation5 + $0x268] sm:$0xff]
    %v183 = vld [vmem:[#allocation5 + $0x270] sm:$0xff]
    %v184 = vld [vmem:[#allocation5 + $0x278] sm:$0xff]
    %v185 = vld [vmem:[#allocation5 + $0x280] sm:$0xff]
    %v186 = vld [vmem:[#allocation5 + $0x288] sm:$0xff]
    %v187 = vld [vmem:[#allocation5 + $0x290] sm:$0xff]
    %v188 = vld [vmem:[#allocation5 + $0x298] sm:$0xff]
    %v189 = vld [vmem:[#allocation5 + $0x2a0] sm:$0xff]
    %v190 = vld [vmem:[#allocation5 + $0x2a8] sm:$0xff]
    %v191 = vld [vmem:[#allocation5 + $0x2b0] sm:$0xff]
    %v192 = vld [vmem:[#allocation5 + $0x2b8] sm:$0xff]
    %v193 = vld [vmem:[#allocation5 + $0x2c0] sm:$0xff]
    %v194 = vld [vmem:[#allocation5 + $0x2c8] sm:$0xff]
    %v195 = vld [vmem:[#allocation5 + $0x2d0] sm:$0xff]
    %v196 = vld [vmem:[#allocation5 + $0x2d8] sm:$0xff]
    %v197 = vld [vmem:[#allocation5 + $0x2e0] sm:$0xff]
    %v198 = vld [vmem:[#allocation5 + $0x2e8] sm:$0xff]
    %v199 = vld [vmem:[#allocation5 + $0x2f0] sm:$0xff]
    %v200 = vld [vmem:[#allocation5 + $0x2f8] sm:$0xff]
    %v201 = vld [vmem:[#allocation5 + $0x300] sm:$0xff]
    %v202 = vld [vmem:[#allocation5 + $0x308] sm:$0xff]
    %v203 = vld [vmem:[#allocation5 + $0x310] sm:$0xff]
    %v204 = vld [vmem:[#allocation5 + $0x318] sm:$0xff]
    %v205 = vld [vmem:[#allocation5 + $0x320] sm:$0xff]
    %v206 = vld [vmem:[#allocation5 + $0x328] sm:$0xff]
    %v207 = vld [vmem:[#allocation5 + $0x330] sm:$0xff]
    %v208 = vld [vmem:[#allocation5 + $0x338] sm:$0xff]
    %v209 = vld [vmem:[#allocation5 + $0x340] sm:$0xff]
    %v210 = vld [vmem:[#allocation5 + $0x348] sm:$0xff]
    %v211 = vld [vmem:[#allocation5 + $0x350] sm:$0xff]
    %v212 = vld [vmem:[#allocation5 + $0x358] sm:$0xff]
    %v213 = vld [vmem:[#allocation5 + $0x360] sm:$0xff]
    %v214 = vld [vmem:[#allocation5 + $0x368] sm:$0xff]
    %v215 = vld [vmem:[#allocation5 + $0x370] sm:$0xff]
    %v216 = vld [vmem:[#allocation5 + $0x378] sm:$0xff]
    %v217 = vld [vmem:[#allocation5 + $0x380] sm:$0xff]
    %v218 = vld [vmem:[#allocation5 + $0x388] sm:$0xff]
    %v219 = vld [vmem:[#allocation5 + $0x390] sm:$0xff]
    %v220 = vld [vmem:[#allocation5 + $0x398] sm:$0xff]
    %v221 = vld [vmem:[#allocation5 + $0x3a0] sm:$0xff]
    %v222 = vld [vmem:[#allocation5 + $0x3a8] sm:$0xff]
    %v223 = vld [vmem:[#allocation5 + $0x3b0] sm:$0xff]
    %v224 = vld [vmem:[#allocation5 + $0x3b8] sm:$0xff]
    %v225 = vld [vmem:[#allocation5 + $0x3c0] sm:$0xff]
    %v226 = vld [vmem:[#allocation5 + $0x3c8] sm:$0xff]
    %v227 = vld [vmem:[#allocation5 + $0x3d0] sm:$0xff]
    %v228 = vld [vmem:[#allocation5 + $0x3d8] sm:$0xff]
    %v229 = vld [vmem:[#allocation5 + $0x3e0] sm:$0xff]
    %v230 = vld [vmem:[#allocation5 + $0x3e8] sm:$0xff]
    %v231 = vld [vmem:[#allocation5 + $0x3f0] sm:$0xff]
    %v232 = vld [vmem:[#allocation5 + $0x3f8] sm:$0xff]
    %v233 = vld [vmem:[#allocation5 + $0x400] sm:$0xff]
    %v234 = vld [vmem:[#allocation5 + $0x408] sm:$0xff]
    %v235 = vld [vmem:[#allocation5 + $0x410] sm:$0xff]
    %v236 = vld [vmem:[#allocation5 + $0x418] sm:$0xff]
    %v237 = vld [vmem:[#allocation5 + $0x420] sm:$0xff]
    %v238 = vld [vmem:[#allocation5 + $0x428] sm:$0xff]
    %v239 = vld [vmem:[#allocation5 + $0x430] sm:$0xff]
    %v240 = vld [vmem:[#allocation5 + $0x438] sm:$0xff]
    %v241 = vld [vmem:[#allocation5 + $0x440] sm:$0xff]
    %v242 = vld [vmem:[#allocation5 + $0x448] sm:$0xff]
    %v243 = vld [vmem:[#allocation5 + $0x450] sm:$0xff]
    %v244 = vld [vmem:[#allocation5 + $0x458] sm:$0xff]
    %v245 = vld [vmem:[#allocation5 + $0x460] sm:$0xff]
    %v246 = vld [vmem:[#allocation5 + $0x468] sm:$0xff]
    %v247 = vld [vmem:[#allocation5 + $0x470] sm:$0xff]
    %v248 = vld [vmem:[#allocation5 + $0x478] sm:$0xff]
    %v249 = vld [vmem:[#allocation5 + $0x480] sm:$0xff]
    %v250 = vld [vmem:[#allocation5 + $0x488] sm:$0xff]
    %v251 = vld [vmem:[#allocation5 + $0x490] sm:$0xff]
    %v252 = vld [vmem:[#allocation5 + $0x498] sm:$0xff]
    %v253 = vld [vmem:[#allocation5 + $0x4a0] sm:$0xff]
    %v254 = vld [vmem:[#allocation5 + $0x4a8] sm:$0xff]
    %v255 = vld [vmem:[#allocation5 + $0x4b0] sm:$0xff]
    %v256 = vld [vmem:[#allocation5 + $0x4b8] sm:$0xff]
    %v257 = vld [vmem:[#allocation5 + $0x4c0] sm:$0xff]
    %v258 = vld [vmem:[#allocation5 + $0x4c8] sm:$0xff]
    %v259 = vld [vmem:[#allocation5 + $0x4d0] sm:$0xff]
    %v260 = vld [vmem:[#allocation5 + $0x4d8] sm:$0xff]
    %v261 = vld [vmem:[#allocation5 + $0x4e0] sm:$0xff]
    %v262 = vld [vmem:[#allocation5 + $0x4e8] sm:$0xff]
    %v263 = vld [vmem:[#allocation5 + $0x4f0] sm:$0xff]
    %v264 = vld [vmem:[#allocation5 + $0x4f8] sm:$0xff]
    %v265 = vld [vmem:[#allocation5 + $0x500] sm:$0xff]
    %v266 = vld [vmem:[#allocation5 + $0x508] sm:$0xff]
    %v267 = vld [vmem:[#allocation5 + $0x510] sm:$0xff]
    %v268 = vld [vmem:[#allocation5 + $0x518] sm:$0xff]
    %v269 = vld [vmem:[#allocation5 + $0x520] sm:$0xff]
    %v270 = vld [vmem:[#allocation5 + $0x528] sm:$0xff]
    %v271 = vld [vmem:[#allocation5 + $0x530] sm:$0xff]
    %v272 = vld [vmem:[#allocation5 + $0x538] sm:$0xff]
    %v273 = vld [vmem:[#allocation5 + $0x540] sm:$0xff]
    %v274 = vld [vmem:[#allocation5 + $0x548] sm:$0xff]
    %v275 = vld [vmem:[#allocation5 + $0x550] sm:$0xff]
    %v276 = vld [vmem:[#allocation5 + $0x558] sm:$0xff]
    %v277 = vld [vmem:[#allocation5 + $0x560] sm:$0xff]
    %v278 = vld [vmem:[#allocation5 + $0x568] sm:$0xff]
    %v279 = vld [vmem:[#allocation5 + $0x570] sm:$0xff]
    %v280 = vld [vmem:[#allocation5 + $0x578] sm:$0xff]
    %v281 = vld [vmem:[#allocation5 + $0x580] sm:$0xff]
    %v282 = vld [vmem:[#allocation5 + $0x588] sm:$0xff]
    %v283 = vld [vmem:[#allocation5 + $0x590] sm:$0xff]
    %v284 = vld [vmem:[#allocation5 + $0x598] sm:$0xff]
    %v285 = vld [vmem:[#allocation5 + $0x5a0] sm:$0xff]
    %v286 = vld [vmem:[#allocation5 + $0x5a8] sm:$0xff]
    %v287 = vld [vmem:[#allocation5 + $0x5b0] sm:$0xff]
    %v288 = vld [vmem:[#allocation5 + $0x5b8] sm:$0xff]
    %v289 = vld [vmem:[#allocation5 + $0x5c0] sm:$0xff]
    %v290 = vld [vmem:[#allocation5 + $0x5c8] sm:$0xff]
    %v291 = vld [vmem:[#allocation5 + $0x5d0] sm:$0xff]
    %v292 = vld [vmem:[#allocation5 + $0x5d8] sm:$0xff]
    %v293 = vld [vmem:[#allocation5 + $0x5e0] sm:$0xff]
    %v294 = vld [vmem:[#allocation5 + $0x5e8] sm:$0xff]
    %v295 = vld [vmem:[#allocation5 + $0x5f0] sm:$0xff]
    %v296 = vld [vmem:[#allocation5 + $0x5f8] sm:$0xff]
    %v297 = vld [vmem:[#allocation5 + $0x600] sm:$0xff]
    %v298 = vld [vmem:[#allocation5 + $0x608] sm:$0xff]
    %v299 = vld [vmem:[#allocation5 + $0x610] sm:$0xff]
    %v300 = vld [vmem:[#allocation5 + $0x618] sm:$0xff]
    %v301 = vld [vmem:[%s2] sm:$0xf]
    %v303 = vlaneseq
    %v304 = vshrl.u32 %v303, 7
    %v305 = vsub.s32 0, %v304
    %v306 = vrot.slane %v301, %v305
    %v307 = vlaneseq
    %v308 = vshrl.u32 %v307, 7
    %v309 = vsub.s32 1, %v308
    %v310 = vrot.slane %v301, %v309
    %v311 = vlaneseq
    %v312 = vshrl.u32 %v311, 7
    %v313 = vsub.s32 2, %v312
    %v314 = vrot.slane %v301, %v313
    %v315 = vlaneseq
    %v316 = vshrl.u32 %v315, 7
    %v317 = vsub.s32 3, %v316
    %v318 = vrot.slane %v301, %v317
    %v519 = vunpack.c.l.b16 %v105
    %v520 = vunpack.c.h.b16 %v105
    %v521 = vunpack.c.l.b16 %v106
    %v522 = vunpack.c.h.b16 %v106
    %v523 = vunpack.c.l.b16 %v107
    %v524 = vunpack.c.h.b16 %v107
    %v525 = vunpack.c.l.b16 %v108
    %v526 = vunpack.c.h.b16 %v108
    %v527 = vunpack.c.l.b16 %v109
    %v528 = vunpack.c.h.b16 %v109
    %v529 = vunpack.c.l.b16 %v110
    %v530 = vunpack.c.h.b16 %v110
    %v531 = vunpack.c.l.b16 %v111
    %v532 = vunpack.c.h.b16 %v111
    %v533 = vunpack.c.l.b16 %v112
    %v534 = vunpack.c.h.b16 %v112
    %v535 = vunpack.c.l.b16 %v113
    %v536 = vunpack.c.h.b16 %v113
    %v537 = vunpack.c.l.b16 %v114
    %v538 = vunpack.c.h.b16 %v114
    %v539 = vunpack.c.l.b16 %v115
    %v540 = vunpack.c.h.b16 %v115
    %v541 = vunpack.c.l.b16 %v116
    %v542 = vunpack.c.h.b16 %v116
    %v543 = vunpack.c.l.b16 %v117
    %v544 = vunpack.c.h.b16 %v117
    %v545 = vunpack.c.l.b16 %v118
    %v546 = vunpack.c.h.b16 %v118
    %v547 = vunpack.c.l.b16 %v119
    %v548 = vunpack.c.h.b16 %v119
    %v549 = vunpack.c.l.b16 %v120
    %v550 = vunpack.c.h.b16 %v120
    %v551 = vunpack.c.l.b16 %v121
    %v552 = vunpack.c.h.b16 %v121
    %v553 = vunpack.c.l.b16 %v122
    %v554 = vunpack.c.h.b16 %v122
    %v555 = vunpack.c.l.b16 %v123
    %v556 = vunpack.c.h.b16 %v123
    %v557 = vunpack.c.l.b16 %v124
    %v558 = vunpack.c.h.b16 %v124
    %v559 = vunpack.c.l.b16 %v125
    %v560 = vunpack.c.h.b16 %v125
    %v561 = vunpack.c.l.b16 %v126
    %v562 = vunpack.c.h.b16 %v126
    %v563 = vunpack.c.l.b16 %v127
    %v564 = vunpack.c.h.b16 %v127
    %v565 = vunpack.c.l.b16 %v128
    %v566 = vunpack.c.h.b16 %v128
    %v567 = vunpack.c.l.b16 %v129
    %v568 = vunpack.c.h.b16 %v129
    %v569 = vunpack.c.l.b16 %v130
    %v570 = vunpack.c.h.b16 %v130
    %v571 = vunpack.c.l.b16 %v131
    %v572 = vunpack.c.h.b16 %v131
    %v573 = vunpack.c.l.b16 %v132
    %v574 = vunpack.c.h.b16 %v132
    %v575 = vunpack.c.l.b16 %v133
    %v576 = vunpack.c.h.b16 %v133
    %v577 = vunpack.c.l.b16 %v134
    %v578 = vunpack.c.h.b16 %v134
    %v579 = vunpack.c.l.b16 %v135
    %v580 = vunpack.c.h.b16 %v135
    %v581 = vunpack.c.l.b16 %v136
    %v582 = vunpack.c.h.b16 %v136
    %v583 = vunpack.c.l.b16 %v137
    %v584 = vunpack.c.h.b16 %v137
    %v585 = vunpack.c.l.b16 %v138
    %v586 = vunpack.c.h.b16 %v138
    %v587 = vunpack.c.l.b16 %v139
    %v588 = vunpack.c.h.b16 %v139
    %v589 = vunpack.c.l.b16 %v140
    %v590 = vunpack.c.h.b16 %v140
    %v591 = vunpack.c.l.b16 %v141
    %v592 = vunpack.c.h.b16 %v141
    %v593 = vunpack.c.l.b16 %v142
    %v594 = vunpack.c.h.b16 %v142
    %v595 = vunpack.c.l.b16 %v143
    %v596 = vunpack.c.h.b16 %v143
    %v597 = vunpack.c.l.b16 %v144
    %v598 = vunpack.c.h.b16 %v144
    %v599 = vunpack.c.l.b16 %v145
    %v600 = vunpack.c.h.b16 %v145
    %v601 = vunpack.c.l.b16 %v146
    %v602 = vunpack.c.h.b16 %v146
    %v603 = vunpack.c.l.b16 %v147
    %v604 = vunpack.c.h.b16 %v147
    %v605 = vunpack.c.l.b16 %v148
    %v606 = vunpack.c.h.b16 %v148
    %v607 = vunpack.c.l.b16 %v149
    %v608 = vunpack.c.h.b16 %v149
    %v609 = vunpack.c.l.b16 %v150
    %v610 = vunpack.c.h.b16 %v150
    %v611 = vunpack.c.l.b16 %v151
    %v612 = vunpack.c.h.b16 %v151
    %v613 = vunpack.c.l.b16 %v152
    %v614 = vunpack.c.h.b16 %v152
    %v615 = vunpack.c.l.b16 %v153
    %v616 = vunpack.c.h.b16 %v153
    %v617 = vunpack.c.l.b16 %v154
    %v618 = vunpack.c.h.b16 %v154
    %v619 = vunpack.c.l.b16 %v155
    %v620 = vunpack.c.h.b16 %v155
    %v621 = vunpack.c.l.b16 %v156
    %v622 = vunpack.c.h.b16 %v156
    %v623 = vunpack.c.l.b16 %v157
    %v624 = vunpack.c.h.b16 %v157
    %v625 = vunpack.c.l.b16 %v158
    %v626 = vunpack.c.h.b16 %v158
    %v627 = vunpack.c.l.b16 %v159
    %v628 = vunpack.c.h.b16 %v159
    %v629 = vunpack.c.l.b16 %v160
    %v630 = vunpack.c.h.b16 %v160
    %v631 = vunpack.c.l.b16 %v161
    %v632 = vunpack.c.h.b16 %v161
    %v633 = vunpack.c.l.b16 %v162
    %v634 = vunpack.c.h.b16 %v162
    %v635 = vunpack.c.l.b16 %v163
    %v636 = vunpack.c.h.b16 %v163
    %v637 = vunpack.c.l.b16 %v164
    %v638 = vunpack.c.h.b16 %v164
    %v639 = vunpack.c.l.b16 %v165
    %v640 = vunpack.c.h.b16 %v165
    %v641 = vunpack.c.l.b16 %v166
    %v642 = vunpack.c.h.b16 %v166
    %v643 = vunpack.c.l.b16 %v167
    %v644 = vunpack.c.h.b16 %v167
    %v645 = vunpack.c.l.b16 %v168
    %v646 = vunpack.c.h.b16 %v168
    %v647 = vunpack.c.l.b16 %v169
    %v648 = vunpack.c.h.b16 %v169
    %v649 = vunpack.c.l.b16 %v170
    %v650 = vunpack.c.h.b16 %v170
    %v651 = vunpack.c.l.b16 %v171
    %v652 = vunpack.c.h.b16 %v171
    %v653 = vunpack.c.l.b16 %v172
    %v654 = vunpack.c.h.b16 %v172
    %v655 = vunpack.c.l.b16 %v173
    %v656 = vunpack.c.h.b16 %v173
    %v657 = vunpack.c.l.b16 %v174
    %v658 = vunpack.c.h.b16 %v174
    %v659 = vunpack.c.l.b16 %v175
    %v660 = vunpack.c.h.b16 %v175
    %v661 = vunpack.c.l.b16 %v176
    %v662 = vunpack.c.h.b16 %v176
    %v663 = vunpack.c.l.b16 %v177
    %v664 = vunpack.c.h.b16 %v177
    %v665 = vunpack.c.l.b16 %v178
    %v666 = vunpack.c.h.b16 %v178
    %v667 = vunpack.c.l.b16 %v179
    %v668 = vunpack.c.h.b16 %v179
    %v669 = vunpack.c.l.b16 %v180
    %v670 = vunpack.c.h.b16 %v180
    %v671 = vunpack.c.l.b16 %v181
    %v672 = vunpack.c.h.b16 %v181
    %v673 = vunpack.c.l.b16 %v182
    %v674 = vunpack.c.h.b16 %v182
    %v675 = vunpack.c.l.b16 %v183
    %v676 = vunpack.c.h.b16 %v183
    %v677 = vunpack.c.l.b16 %v184
    %v678 = vunpack.c.h.b16 %v184
    %v679 = vunpack.c.l.b16 %v185
    %v680 = vunpack.c.h.b16 %v185
    %v681 = vunpack.c.l.b16 %v186
    %v682 = vunpack.c.h.b16 %v186
    %v683 = vunpack.c.l.b16 %v187
    %v684 = vunpack.c.h.b16 %v187
    %v685 = vunpack.c.l.b16 %v188
    %v686 = vunpack.c.h.b16 %v188
    %v687 = vunpack.c.l.b16 %v189
    %v688 = vunpack.c.h.b16 %v189
    %v689 = vunpack.c.l.b16 %v190
    %v690 = vunpack.c.h.b16 %v190
    %v691 = vunpack.c.l.b16 %v191
    %v692 = vunpack.c.h.b16 %v191
    %v693 = vunpack.c.l.b16 %v192
    %v694 = vunpack.c.h.b16 %v192
    %v695 = vunpack.c.l.b16 %v193
    %v696 = vunpack.c.h.b16 %v193
    %v697 = vunpack.c.l.b16 %v194
    %v698 = vunpack.c.h.b16 %v194
    %v699 = vunpack.c.l.b16 %v195
    %v700 = vunpack.c.h.b16 %v195
    %v701 = vunpack.c.l.b16 %v196
    %v702 = vunpack.c.h.b16 %v196
    %v703 = vunpack.c.l.b16 %v197
    %v704 = vunpack.c.h.b16 %v197
    %v705 = vunpack.c.l.b16 %v198
    %v706 = vunpack.c.h.b16 %v198
    %v707 = vunpack.c.l.b16 %v199
    %v708 = vunpack.c.h.b16 %v199
    %v709 = vunpack.c.l.b16 %v200
    %v710 = vunpack.c.h.b16 %v200
    %v711 = vunpack.c.l.b16 %v201
    %v712 = vunpack.c.h.b16 %v201
    %v713 = vunpack.c.l.b16 %v202
    %v714 = vunpack.c.h.b16 %v202
    %v715 = vunpack.c.l.b16 %v203
    %v716 = vunpack.c.h.b16 %v203
    %v717 = vunpack.c.l.b16 %v204
    %v718 = vunpack.c.h.b16 %v204
    %v719 = vunpack.c.l.b16 %v205
    %v720 = vunpack.c.h.b16 %v205
    %v721 = vunpack.c.l.b16 %v206
    %v722 = vunpack.c.h.b16 %v206
    %v723 = vunpack.c.l.b16 %v207
    %v724 = vunpack.c.h.b16 %v207
    %v725 = vunpack.c.l.b16 %v208
    %v726 = vunpack.c.h.b16 %v208
    %v727 = vunpack.c.l.b16 %v209
    %v728 = vunpack.c.h.b16 %v209
    %v729 = vunpack.c.l.b16 %v210
    %v730 = vunpack.c.h.b16 %v210
    %v731 = vunpack.c.l.b16 %v211
    %v732 = vunpack.c.h.b16 %v211
    %v733 = vunpack.c.l.b16 %v212
    %v734 = vunpack.c.h.b16 %v212
    %v735 = vunpack.c.l.b16 %v213
    %v736 = vunpack.c.h.b16 %v213
    %v737 = vunpack.c.l.b16 %v214
    %v738 = vunpack.c.h.b16 %v214
    %v739 = vunpack.c.l.b16 %v215
    %v740 = vunpack.c.h.b16 %v215
    %v741 = vunpack.c.l.b16 %v216
    %v742 = vunpack.c.h.b16 %v216
    %v743 = vunpack.c.l.b16 %v217
    %v744 = vunpack.c.h.b16 %v217
    %v745 = vunpack.c.l.b16 %v218
    %v746 = vunpack.c.h.b16 %v218
    %v747 = vunpack.c.l.b16 %v219
    %v748 = vunpack.c.h.b16 %v219
    %v749 = vunpack.c.l.b16 %v220
    %v750 = vunpack.c.h.b16 %v220
    %v751 = vunpack.c.l.b16 %v221
    %v752 = vunpack.c.h.b16 %v221
    %v753 = vunpack.c.l.b16 %v222
    %v754 = vunpack.c.h.b16 %v222
    %v755 = vunpack.c.l.b16 %v223
    %v756 = vunpack.c.h.b16 %v223
    %v757 = vunpack.c.l.b16 %v224
    %v758 = vunpack.c.h.b16 %v224
    %v759 = vunpack.c.l.b16 %v225
    %v760 = vunpack.c.h.b16 %v225
    %v761 = vunpack.c.l.b16 %v226
    %v762 = vunpack.c.h.b16 %v226
    %v763 = vunpack.c.l.b16 %v227
    %v764 = vunpack.c.h.b16 %v227
    %v765 = vunpack.c.l.b16 %v228
    %v766 = vunpack.c.h.b16 %v228
    %v767 = vunpack.c.l.b16 %v229
    %v768 = vunpack.c.h.b16 %v229
    %v769 = vunpack.c.l.b16 %v230
    %v770 = vunpack.c.h.b16 %v230
    %v771 = vunpack.c.l.b16 %v231
    %v772 = vunpack.c.h.b16 %v231
    %v773 = vunpack.c.l.b16 %v232
    %v774 = vunpack.c.h.b16 %v232
    %v775 = vunpack.c.l.b16 %v233
    %v776 = vunpack.c.h.b16 %v233
    %v777 = vunpack.c.l.b16 %v234
    %v778 = vunpack.c.h.b16 %v234
    %v779 = vunpack.c.l.b16 %v235
    %v780 = vunpack.c.h.b16 %v235
    %v781 = vunpack.c.l.b16 %v236
    %v782 = vunpack.c.h.b16 %v236
    %v783 = vunpack.c.l.b16 %v237
    %v784 = vunpack.c.h.b16 %v237
    %v785 = vunpack.c.l.b16 %v238
    %v786 = vunpack.c.h.b16 %v238
    %v787 = vunpack.c.l.b16 %v239
    %v788 = vunpack.c.h.b16 %v239
    %v789 = vunpack.c.l.b16 %v240
    %v790 = vunpack.c.h.b16 %v240
    %v791 = vunpack.c.l.b16 %v241
    %v792 = vunpack.c.h.b16 %v241
    %v793 = vunpack.c.l.b16 %v242
    %v794 = vunpack.c.h.b16 %v242
    %v795 = vunpack.c.l.b16 %v243
    %v796 = vunpack.c.h.b16 %v243
    %v797 = vunpack.c.l.b16 %v244
    %v798 = vunpack.c.h.b16 %v244
    %v799 = vunpack.c.l.b16 %v245
    %v800 = vunpack.c.h.b16 %v245
    %v801 = vunpack.c.l.b16 %v246
    %v802 = vunpack.c.h.b16 %v246
    %v803 = vunpack.c.l.b16 %v247
    %v804 = vunpack.c.h.b16 %v247
    %v805 = vunpack.c.l.b16 %v248
    %v806 = vunpack.c.h.b16 %v248
    %v807 = vunpack.c.l.b16 %v249
    %v808 = vunpack.c.h.b16 %v249
    %v809 = vunpack.c.l.b16 %v250
    %v810 = vunpack.c.h.b16 %v250
    %v811 = vunpack.c.l.b16 %v251
    %v812 = vunpack.c.h.b16 %v251
    %v813 = vunpack.c.l.b16 %v252
    %v814 = vunpack.c.h.b16 %v252
    %v815 = vunpack.c.l.b16 %v253
    %v816 = vunpack.c.h.b16 %v253
    %v817 = vunpack.c.l.b16 %v254
    %v818 = vunpack.c.h.b16 %v254
    %v819 = vunpack.c.l.b16 %v255
    %v820 = vunpack.c.h.b16 %v255
    %v821 = vunpack.c.l.b16 %v256
    %v822 = vunpack.c.h.b16 %v256
    %v823 = vunpack.c.l.b16 %v257
    %v824 = vunpack.c.h.b16 %v257
    %v825 = vunpack.c.l.b16 %v258
    %v826 = vunpack.c.h.b16 %v258
    %v827 = vunpack.c.l.b16 %v259
    %v828 = vunpack.c.h.b16 %v259
    %v829 = vunpack.c.l.b16 %v260
    %v830 = vunpack.c.h.b16 %v260
    %v831 = vunpack.c.l.b16 %v261
    %v832 = vunpack.c.h.b16 %v261
    %v833 = vunpack.c.l.b16 %v262
    %v834 = vunpack.c.h.b16 %v262
    %v835 = vunpack.c.l.b16 %v263
    %v836 = vunpack.c.h.b16 %v263
    %v837 = vunpack.c.l.b16 %v264
    %v838 = vunpack.c.h.b16 %v264
    %v839 = vunpack.c.l.b16 %v265
    %v840 = vunpack.c.h.b16 %v265
    %v841 = vunpack.c.l.b16 %v266
    %v842 = vunpack.c.h.b16 %v266
    %v843 = vunpack.c.l.b16 %v267
    %v844 = vunpack.c.h.b16 %v267
    %v845 = vunpack.c.l.b16 %v268
    %v846 = vunpack.c.h.b16 %v268
    %v847 = vunpack.c.l.b16 %v269
    %v848 = vunpack.c.h.b16 %v269
    %v849 = vunpack.c.l.b16 %v270
    %v850 = vunpack.c.h.b16 %v270
    %v851 = vunpack.c.l.b16 %v271
    %v852 = vunpack.c.h.b16 %v271
    %v853 = vunpack.c.l.b16 %v272
    %v854 = vunpack.c.h.b16 %v272
    %v855 = vunpack.c.l.b16 %v273
    %v856 = vunpack.c.h.b16 %v273
    %v857 = vunpack.c.l.b16 %v274
    %v858 = vunpack.c.h.b16 %v274
    %v859 = vunpack.c.l.b16 %v275
    %v860 = vunpack.c.h.b16 %v275
    %v861 = vunpack.c.l.b16 %v276
    %v862 = vunpack.c.h.b16 %v276
    %v863 = vunpack.c.l.b16 %v277
    %v864 = vunpack.c.h.b16 %v277
    %v865 = vunpack.c.l.b16 %v278
    %v866 = vunpack.c.h.b16 %v278
    %v867 = vunpack.c.l.b16 %v279
    %v868 = vunpack.c.h.b16 %v279
    %v869 = vunpack.c.l.b16 %v280
    %v870 = vunpack.c.h.b16 %v280
    %v871 = vunpack.c.l.b16 %v281
    %v872 = vunpack.c.h.b16 %v281
    %v873 = vunpack.c.l.b16 %v282
    %v874 = vunpack.c.h.b16 %v282
    %v875 = vunpack.c.l.b16 %v283
    %v876 = vunpack.c.h.b16 %v283
    %v877 = vunpack.c.l.b16 %v284
    %v878 = vunpack.c.h.b16 %v284
    %v879 = vunpack.c.l.b16 %v285
    %v880 = vunpack.c.h.b16 %v285
    %v881 = vunpack.c.l.b16 %v286
    %v882 = vunpack.c.h.b16 %v286
    %v883 = vunpack.c.l.b16 %v287
    %v884 = vunpack.c.h.b16 %v287
    %v885 = vunpack.c.l.b16 %v288
    %v886 = vunpack.c.h.b16 %v288
    %v887 = vunpack.c.l.b16 %v289
    %v888 = vunpack.c.h.b16 %v289
    %v889 = vunpack.c.l.b16 %v290
    %v890 = vunpack.c.h.b16 %v290
    %v891 = vunpack.c.l.b16 %v291
    %v892 = vunpack.c.h.b16 %v291
    %v893 = vunpack.c.l.b16 %v292
    %v894 = vunpack.c.h.b16 %v292
    %v895 = vunpack.c.l.b16 %v293
    %v896 = vunpack.c.h.b16 %v293
    %v897 = vunpack.c.l.b16 %v294
    %v898 = vunpack.c.h.b16 %v294
    %v899 = vunpack.c.l.b16 %v295
    %v900 = vunpack.c.h.b16 %v295
    %v901 = vunpack.c.l.b16 %v296
    %v902 = vunpack.c.h.b16 %v296
    %v903 = vunpack.c.l.b16 %v297
    %v904 = vunpack.c.h.b16 %v297
    %v905 = vunpack.c.l.b16 %v298
    %v906 = vunpack.c.h.b16 %v298
    %v907 = vunpack.c.l.b16 %v299
    %v908 = vunpack.c.h.b16 %v299
    %v909 = vunpack.c.l.b16 %v300
    %v910 = vunpack.c.h.b16 %v300
    %v911 = vpack.c.b16 %v523, %v519
    %v912 = vpack.c.b16 %v524, %v520
    %v913 = vpack.c.b16 %v525, %v521
    %v914 = vpack.c.b16 %v526, %v522
    %v915 = vpack.c.b16 %v531, %v527
    %v916 = vpack.c.b16 %v532, %v528
    %v917 = vpack.c.b16 %v533, %v529
    %v918 = vpack.c.b16 %v534, %v530
    %v919 = vpack.c.b16 %v539, %v535
    %v920 = vpack.c.b16 %v540, %v536
    %v921 = vpack.c.b16 %v541, %v537
    %v922 = vpack.c.b16 %v542, %v538
    %v923 = vpack.c.b16 %v547, %v543
    %v924 = vpack.c.b16 %v548, %v544
    %v925 = vpack.c.b16 %v549, %v545
    %v926 = vpack.c.b16 %v550, %v546
    %v927 = vpack.c.b16 %v555, %v551
    %v928 = vpack.c.b16 %v556, %v552
    %v929 = vpack.c.b16 %v557, %v553
    %v930 = vpack.c.b16 %v558, %v554
    %v931 = vpack.c.b16 %v563, %v559
    %v932 = vpack.c.b16 %v564, %v560
    %v933 = vpack.c.b16 %v565, %v561
    %v934 = vpack.c.b16 %v566, %v562
    %v935 = vpack.c.b16 %v571, %v567
    %v936 = vpack.c.b16 %v572, %v568
    %v937 = vpack.c.b16 %v573, %v569
    %v938 = vpack.c.b16 %v574, %v570
    %v939 = vpack.c.b16 %v579, %v575
    %v940 = vpack.c.b16 %v580, %v576
    %v941 = vpack.c.b16 %v581, %v577
    %v942 = vpack.c.b16 %v582, %v578
    %v943 = vpack.c.b16 %v587, %v583
    %v944 = vpack.c.b16 %v588, %v584
    %v945 = vpack.c.b16 %v589, %v585
    %v946 = vpack.c.b16 %v590, %v586
    %v947 = vpack.c.b16 %v595, %v591
    %v948 = vpack.c.b16 %v596, %v592
    %v949 = vpack.c.b16 %v597, %v593
    %v950 = vpack.c.b16 %v598, %v594
    %v951 = vpack.c.b16 %v603, %v599
    %v952 = vpack.c.b16 %v604, %v600
    %v953 = vpack.c.b16 %v605, %v601
    %v954 = vpack.c.b16 %v606, %v602
    %v955 = vpack.c.b16 %v611, %v607
    %v956 = vpack.c.b16 %v612, %v608
    %v957 = vpack.c.b16 %v613, %v609
    %v958 = vpack.c.b16 %v614, %v610
    %v959 = vpack.c.b16 %v619, %v615
    %v960 = vpack.c.b16 %v620, %v616
    %v961 = vpack.c.b16 %v621, %v617
    %v962 = vpack.c.b16 %v622, %v618
    %v963 = vpack.c.b16 %v627, %v623
    %v964 = vpack.c.b16 %v628, %v624
    %v965 = vpack.c.b16 %v629, %v625
    %v966 = vpack.c.b16 %v630, %v626
    %v967 = vpack.c.b16 %v635, %v631
    %v968 = vpack.c.b16 %v636, %v632
    %v969 = vpack.c.b16 %v637, %v633
    %v970 = vpack.c.b16 %v638, %v634
    %v971 = vpack.c.b16 %v643, %v639
    %v972 = vpack.c.b16 %v644, %v640
    %v973 = vpack.c.b16 %v645, %v641
    %v974 = vpack.c.b16 %v646, %v642
    %v975 = vpack.c.b16 %v651, %v647
    %v976 = vpack.c.b16 %v652, %v648
    %v977 = vpack.c.b16 %v653, %v649
    %v978 = vpack.c.b16 %v654, %v650
    %v979 = vpack.c.b16 %v659, %v655
    %v980 = vpack.c.b16 %v660, %v656
    %v981 = vpack.c.b16 %v661, %v657
    %v982 = vpack.c.b16 %v662, %v658
    %v983 = vpack.c.b16 %v667, %v663
    %v984 = vpack.c.b16 %v668, %v664
    %v985 = vpack.c.b16 %v669, %v665
    %v986 = vpack.c.b16 %v670, %v666
    %v987 = vpack.c.b16 %v675, %v671
    %v988 = vpack.c.b16 %v676, %v672
    %v989 = vpack.c.b16 %v677, %v673
    %v990 = vpack.c.b16 %v678, %v674
    %v991 = vpack.c.b16 %v683, %v679
    %v992 = vpack.c.b16 %v684, %v680
    %v993 = vpack.c.b16 %v685, %v681
    %v994 = vpack.c.b16 %v686, %v682
    %v995 = vpack.c.b16 %v691, %v687
    %v996 = vpack.c.b16 %v692, %v688
    %v997 = vpack.c.b16 %v693, %v689
    %v998 = vpack.c.b16 %v694, %v690
    %v999 = vpack.c.b16 %v699, %v695
    %v1000 = vpack.c.b16 %v700, %v696
    %v1001 = vpack.c.b16 %v701, %v697
    %v1002 = vpack.c.b16 %v702, %v698
    %v1003 = vpack.c.b16 %v707, %v703
    %v1004 = vpack.c.b16 %v708, %v704
    %v1005 = vpack.c.b16 %v709, %v705
    %v1006 = vpack.c.b16 %v710, %v706
    %v1007 = vpack.c.b16 %v715, %v711
    %v1008 = vpack.c.b16 %v716, %v712
    %v1009 = vpack.c.b16 %v717, %v713
    %v1010 = vpack.c.b16 %v718, %v714
    %v1011 = vpack.c.b16 %v723, %v719
    %v1012 = vpack.c.b16 %v724, %v720
    %v1013 = vpack.c.b16 %v725, %v721
    %v1014 = vpack.c.b16 %v726, %v722
    %v1015 = vpack.c.b16 %v731, %v727
    %v1016 = vpack.c.b16 %v732, %v728
    %v1017 = vpack.c.b16 %v733, %v729
    %v1018 = vpack.c.b16 %v734, %v730
    %v1019 = vpack.c.b16 %v739, %v735
    %v1020 = vpack.c.b16 %v740, %v736
    %v1021 = vpack.c.b16 %v741, %v737
    %v1022 = vpack.c.b16 %v742, %v738
    %v1023 = vpack.c.b16 %v747, %v743
    %v1024 = vpack.c.b16 %v748, %v744
    %v1025 = vpack.c.b16 %v749, %v745
    %v1026 = vpack.c.b16 %v750, %v746
    %v1027 = vpack.c.b16 %v755, %v751
    %v1028 = vpack.c.b16 %v756, %v752
    %v1029 = vpack.c.b16 %v757, %v753
    %v1030 = vpack.c.b16 %v758, %v754
    %v1031 = vpack.c.b16 %v763, %v759
    %v1032 = vpack.c.b16 %v764, %v760
    %v1033 = vpack.c.b16 %v765, %v761
    %v1034 = vpack.c.b16 %v766, %v762
    %v1035 = vpack.c.b16 %v771, %v767
    %v1036 = vpack.c.b16 %v772, %v768
    %v1037 = vpack.c.b16 %v773, %v769
    %v1038 = vpack.c.b16 %v774, %v770
    %v1039 = vpack.c.b16 %v779, %v775
    %v1040 = vpack.c.b16 %v780, %v776
    %v1041 = vpack.c.b16 %v781, %v777
    %v1042 = vpack.c.b16 %v782, %v778
    %v1043 = vpack.c.b16 %v787, %v783
    %v1044 = vpack.c.b16 %v788, %v784
    %v1045 = vpack.c.b16 %v789, %v785
    %v1046 = vpack.c.b16 %v790, %v786
    %v1047 = vpack.c.b16 %v795, %v791
    %v1048 = vpack.c.b16 %v796, %v792
    %v1049 = vpack.c.b16 %v797, %v793
    %v1050 = vpack.c.b16 %v798, %v794
    %v1051 = vpack.c.b16 %v803, %v799
    %v1052 = vpack.c.b16 %v804, %v800
    %v1053 = vpack.c.b16 %v805, %v801
    %v1054 = vpack.c.b16 %v806, %v802
    %v1055 = vpack.c.b16 %v811, %v807
    %v1056 = vpack.c.b16 %v812, %v808
    %v1057 = vpack.c.b16 %v813, %v809
    %v1058 = vpack.c.b16 %v814, %v810
    %v1059 = vpack.c.b16 %v819, %v815
    %v1060 = vpack.c.b16 %v820, %v816
    %v1061 = vpack.c.b16 %v821, %v817
    %v1062 = vpack.c.b16 %v822, %v818
    %v1063 = vpack.c.b16 %v827, %v823
    %v1064 = vpack.c.b16 %v828, %v824
    %v1065 = vpack.c.b16 %v829, %v825
    %v1066 = vpack.c.b16 %v830, %v826
    %v1067 = vpack.c.b16 %v835, %v831
    %v1068 = vpack.c.b16 %v836, %v832
    %v1069 = vpack.c.b16 %v837, %v833
    %v1070 = vpack.c.b16 %v838, %v834
    %v1071 = vpack.c.b16 %v843, %v839
    %v1072 = vpack.c.b16 %v844, %v840
    %v1073 = vpack.c.b16 %v845, %v841
    %v1074 = vpack.c.b16 %v846, %v842
    %v1075 = vpack.c.b16 %v851, %v847
    %v1076 = vpack.c.b16 %v852, %v848
    %v1077 = vpack.c.b16 %v853, %v849
    %v1078 = vpack.c.b16 %v854, %v850
    %v1079 = vpack.c.b16 %v859, %v855
    %v1080 = vpack.c.b16 %v860, %v856
    %v1081 = vpack.c.b16 %v861, %v857
    %v1082 = vpack.c.b16 %v862, %v858
    %v1083 = vpack.c.b16 %v867, %v863
    %v1084 = vpack.c.b16 %v868, %v864
    %v1085 = vpack.c.b16 %v869, %v865
    %v1086 = vpack.c.b16 %v870, %v866
    %v1087 = vpack.c.b16 %v875, %v871
    %v1088 = vpack.c.b16 %v876, %v872
    %v1089 = vpack.c.b16 %v877, %v873
    %v1090 = vpack.c.b16 %v878, %v874
    %v1091 = vpack.c.b16 %v883, %v879
    %v1092 = vpack.c.b16 %v884, %v880
    %v1093 = vpack.c.b16 %v885, %v881
    %v1094 = vpack.c.b16 %v886, %v882
    %v1095 = vpack.c.b16 %v891, %v887
    %v1096 = vpack.c.b16 %v892, %v888
    %v1097 = vpack.c.b16 %v893, %v889
    %v1098 = vpack.c.b16 %v894, %v890
    %v1099 = vpack.c.b16 %v899, %v895
    %v1100 = vpack.c.b16 %v900, %v896
    %v1101 = vpack.c.b16 %v901, %v897
    %v1102 = vpack.c.b16 %v902, %v898
    %v1103 = vpack.c.b16 %v907, %v903
    %v1104 = vpack.c.b16 %v908, %v904
    %v1105 = vpack.c.b16 %v909, %v905
    %v1106 = vpack.c.b16 %v910, %v906
    %vm1303 = vcmask 130048
    %v1305 = vsel %vm1303, %v104, 0
    %1307 = vmatprep.subr.bf16.mxu0 %v940
    %1308 = vmatpush1.bf16.msra.mxu0 %v939
    %1309 = vmatprep.subr.bf16.mxu0 %v936
    %1310 = vmatpush1.bf16.msra.mxu0 %v935
    %1311 = vmatprep.subr.bf16.mxu0 %v932
    %1312 = vmatpush1.bf16.msra.mxu0 %v931
    %1313 = vmatprep.subr.bf16.mxu0 %v928
    %1314 = vmatpush1.bf16.msra.mxu0 %v927
    %1315 = vmatprep.subr.bf16.mxu0 %v924
    %1316 = vmatpush1.bf16.msra.mxu0 %v923
    %1317 = vmatprep.subr.bf16.mxu0 %v920
    %1318 = vmatpush1.bf16.msra.mxu0 %v919
    %1319 = vmatprep.subr.bf16.mxu0 %v916
    %1320 = vmatpush1.bf16.msra.mxu0 %v915
    %1321 = vmatprep.subr.bf16.mxu0 %v912
    %1322 = vmatpush1.bf16.msra.mxu0 %v911
    %1323 = vmatprep.subr.bf16.mxu0 %v972
    %1324 = vmatpush2.bf16.msra.mxu0 %v971
    %1325 = vmatprep.subr.bf16.mxu0 %v968
    %1326 = vmatpush2.bf16.msra.mxu0 %v967
    %1327 = vmatprep.subr.bf16.mxu0 %v964
    %1328 = vmatpush2.bf16.msra.mxu0 %v963
    %1329 = vmatprep.subr.bf16.mxu0 %v960
    %1330 = vmatpush2.bf16.msra.mxu0 %v959
    %1331 = vmatprep.subr.bf16.mxu0 %v956
    %1332 = vmatpush2.bf16.msra.mxu0 %v955
    %1333 = vmatprep.subr.bf16.mxu0 %v952
    %1334 = vmatpush2.bf16.msra.mxu0 %v951
    %1335 = vmatprep.subr.bf16.mxu0 %v948
    %1336 = vmatpush2.bf16.msra.mxu0 %v947
    %1337 = vmatprep.subr.bf16.mxu0 %v944
    %1338 = vmatpush2.bf16.msra.mxu0 %v943
    %1339 = vmatprep.mubr.bf16.mxu0 %v99
    %1340 = vmatmul.mubr.bf16.gmra.mxu0 %v98
    %v1341 = vpop.f32.mrf.mxu0
    %v1342 = vadd.f32 %v306, %v1341
    %v1343 = vpop.f32.mrf.mxu0
    %v1344 = vadd.f32 %v310, %v1343
    %v1345 = vpop.f32.mrf.mxu0
    %v1346 = vadd.f32 %v306, %v1345
    %v1347 = vpop.f32.mrf.mxu0
    %v1348 = vadd.f32 %v310, %v1347
    %1349 = vdwg.mxu0
    %1350 = vmatprep.subr.bf16.mxu0 %v1004
    %1351 = vmatpush1.bf16.msra.mxu0 %v1003
    %1352 = vmatprep.subr.bf16.mxu0 %v1000
    %1353 = vmatpush1.bf16.msra.mxu0 %v999
    %1354 = vmatprep.subr.bf16.mxu0 %v996
    %1355 = vmatpush1.bf16.msra.mxu0 %v995
    %1356 = vmatprep.subr.bf16.mxu0 %v992
    %1357 = vmatpush1.bf16.msra.mxu0 %v991
    %1358 = vmatprep.subr.bf16.mxu0 %v988
    %1359 = vmatpush1.bf16.msra.mxu0 %v987
    %1360 = vmatprep.subr.bf16.mxu0 %v984
    %1361 = vmatpush1.bf16.msra.mxu0 %v983
    %1362 = vmatprep.subr.bf16.mxu0 %v980
    %1363 = vmatpush1.bf16.msra.mxu0 %v979
    %1364 = vmatprep.subr.bf16.mxu0 %v976
    %1365 = vmatpush1.bf16.msra.mxu0 %v975
    %1366 = vmatprep.subr.bf16.mxu0 %v1036
    %1367 = vmatpush2.bf16.msra.mxu0 %v1035
    %1368 = vmatprep.subr.bf16.mxu0 %v1032
    %1369 = vmatpush2.bf16.msra.mxu0 %v1031
    %1370 = vmatprep.subr.bf16.mxu0 %v1028
    %1371 = vmatpush2.bf16.msra.mxu0 %v1027
    %1372 = vmatprep.subr.bf16.mxu0 %v1024
    %1373 = vmatpush2.bf16.msra.mxu0 %v1023
    %1374 = vmatprep.subr.bf16.mxu0 %v1020
    %1375 = vmatpush2.bf16.msra.mxu0 %v1019
    %1376 = vmatprep.subr.bf16.mxu0 %v1016
    %1377 = vmatpush2.bf16.msra.mxu0 %v1015
    %1378 = vmatprep.subr.bf16.mxu0 %v1012
    %1379 = vmatpush2.bf16.msra.mxu0 %v1011
    %1380 = vmatprep.subr.bf16.mxu0 %v1008
    %1381 = vmatpush2.bf16.msra.mxu0 %v1007
    %1382 = vmatprep.mubr.bf16.mxu0 %v101
    %1383 = vmatmul.mubr.bf16.gmra.mxu0 %v100
    %v1384 = vpop.f32.mrf.mxu0
    %v1385 = vadd.f32 %v1342, %v1384
    %v1386 = vpop.f32.mrf.mxu0
    %v1387 = vadd.f32 %v1344, %v1386
    %v1388 = vpop.f32.mrf.mxu0
    %v1389 = vadd.f32 %v1346, %v1388
    %v1390 = vpop.f32.mrf.mxu0
    %v1391 = vadd.f32 %v1348, %v1390
    %1392 = vdwg.mxu0
    %1393 = vmatprep.subr.bf16.mxu0 %v1068
    %1394 = vmatpush1.bf16.msra.mxu0 %v1067
    %1395 = vmatprep.subr.bf16.mxu0 %v1064
    %1396 = vmatpush1.bf16.msra.mxu0 %v1063
    %1397 = vmatprep.subr.bf16.mxu0 %v1060
    %1398 = vmatpush1.bf16.msra.mxu0 %v1059
    %1399 = vmatprep.subr.bf16.mxu0 %v1056
    %1400 = vmatpush1.bf16.msra.mxu0 %v1055
    %1401 = vmatprep.subr.bf16.mxu0 %v1052
    %1402 = vmatpush1.bf16.msra.mxu0 %v1051
    %1403 = vmatprep.subr.bf16.mxu0 %v1048
    %1404 = vmatpush1.bf16.msra.mxu0 %v1047
    %1405 = vmatprep.subr.bf16.mxu0 %v1044
    %1406 = vmatpush1.bf16.msra.mxu0 %v1043
    %1407 = vmatprep.subr.bf16.mxu0 %v1040
    %1408 = vmatpush1.bf16.msra.mxu0 %v1039
    %1409 = vmatprep.subr.bf16.mxu0 %v1100
    %1410 = vmatpush2.bf16.msra.mxu0 %v1099
    %1411 = vmatprep.subr.bf16.mxu0 %v1096
    %1412 = vmatpush2.bf16.msra.mxu0 %v1095
    %1413 = vmatprep.subr.bf16.mxu0 %v1092
    %1414 = vmatpush2.bf16.msra.mxu0 %v1091
    %1415 = vmatprep.subr.bf16.mxu0 %v1088
    %1416 = vmatpush2.bf16.msra.mxu0 %v1087
    %1417 = vmatprep.subr.bf16.mxu0 %v1084
    %1418 = vmatpush2.bf16.msra.mxu0 %v1083
    %1419 = vmatprep.subr.bf16.mxu0 %v1080
    %1420 = vmatpush2.bf16.msra.mxu0 %v1079
    %1421 = vmatprep.subr.bf16.mxu0 %v1076
    %1422 = vmatpush2.bf16.msra.mxu0 %v1075
    %1423 = vmatprep.subr.bf16.mxu0 %v1072
    %1424 = vmatpush2.bf16.msra.mxu0 %v1071
    %1425 = vmatprep.mubr.bf16.mxu0 %v103
    %1426 = vmatmul.mubr.bf16.gmra.mxu0 %v102
    %v1427 = vpop.f32.mrf.mxu0
    %v1428 = vadd.f32 %v1385, %v1427
    %v1429 = vpop.f32.mrf.mxu0
    %v1430 = vadd.f32 %v1387, %v1429
    %v1431 = vpop.f32.mrf.mxu0
    %v1432 = vadd.f32 %v1389, %v1431
    %v1433 = vpop.f32.mrf.mxu0
    %v1434 = vadd.f32 %v1391, %v1433
    %1435 = vdwg.mxu0
    %1436 = vmatprep.subr.bf16.mxu0 0
    %1437 = vmatpush1.bf16.msra.mxu0 0
    %1438 = vmatprep.subr.bf16.mxu0 0
    %1439 = vmatpush1.bf16.msra.mxu0 0
    %1440 = vmatprep.subr.bf16.mxu0 0
    %1441 = vmatpush1.bf16.msra.mxu0 0
    %1442 = vmatprep.subr.bf16.mxu0 0
    %1443 = vmatpush1.bf16.msra.mxu0 0
    %1444 = vmatprep.subr.bf16.mxu0 0
    %1445 = vmatpush1.bf16.msra.mxu0 0
    %1446 = vmatprep.subr.bf16.mxu0 0
    %1447 = vmatpush1.bf16.msra.mxu0 0
    %1448 = vmatprep.subr.bf16.mxu0 0
    %1449 = vmatpush1.bf16.msra.mxu0 0
    %1450 = vmatprep.subr.bf16.mxu0 %v1104
    %1451 = vmatpush1.bf16.msra.mxu0 %v1103
    %1452 = vmatprep.subr.bf16.mxu0 0
    %1453 = vmatpush2.bf16.msra.mxu0 0
    %1454 = vmatprep.subr.bf16.mxu0 0
    %1455 = vmatpush2.bf16.msra.mxu0 0
    %1456 = vmatprep.subr.bf16.mxu0 0
    %1457 = vmatpush2.bf16.msra.mxu0 0
    %1458 = vmatprep.subr.bf16.mxu0 0
    %1459 = vmatpush2.bf16.msra.mxu0 0
    %1460 = vmatprep.subr.bf16.mxu0 0
    %1461 = vmatpush2.bf16.msra.mxu0 0
    %1462 = vmatprep.subr.bf16.mxu0 0
    %1463 = vmatpush2.bf16.msra.mxu0 0
    %1464 = vmatprep.subr.bf16.mxu0 0
    %1465 = vmatpush2.bf16.msra.mxu0 0
    %1466 = vmatprep.subr.bf16.mxu0 0
    %1467 = vmatpush2.bf16.msra.mxu0 0
    %1468 = vmatprep.mubr.bf16.mxu0 0
    %1469 = vmatmul.mubr.bf16.gmra.mxu0 %v1305
    %v1470 = vpop.f32.mrf.mxu0
    %v1471 = vadd.f32 %v1428, %v1470
    %v1472 = vpop.f32.mrf.mxu0
    %v1473 = vadd.f32 %v1430, %v1472
    %v1474 = vpop.f32.mrf.mxu0
    %v1475 = vadd.f32 %v1432, %v1474
    %v1476 = vpop.f32.mrf.mxu0
    %v1477 = vadd.f32 %v1434, %v1476
    %1478 = vdwg.mxu0
    %1479 = vmatprep.subr.bf16.mxu0 %v942
    %1480 = vmatpush1.bf16.msra.mxu0 %v941
    %1481 = vmatprep.subr.bf16.mxu0 %v938
    %1482 = vmatpush1.bf16.msra.mxu0 %v937
    %1483 = vmatprep.subr.bf16.mxu0 %v934
    %1484 = vmatpush1.bf16.msra.mxu0 %v933
    %1485 = vmatprep.subr.bf16.mxu0 %v930
    %1486 = vmatpush1.bf16.msra.mxu0 %v929
    %1487 = vmatprep.subr.bf16.mxu0 %v926
    %1488 = vmatpush1.bf16.msra.mxu0 %v925
    %1489 = vmatprep.subr.bf16.mxu0 %v922
    %1490 = vmatpush1.bf16.msra.mxu0 %v921
    %1491 = vmatprep.subr.bf16.mxu0 %v918
    %1492 = vmatpush1.bf16.msra.mxu0 %v917
    %1493 = vmatprep.subr.bf16.mxu0 %v914
    %1494 = vmatpush1.bf16.msra.mxu0 %v913
    %1495 = vmatprep.subr.bf16.mxu0 %v974
    %1496 = vmatpush2.bf16.msra.mxu0 %v973
    %1497 = vmatprep.subr.bf16.mxu0 %v970
    %1498 = vmatpush2.bf16.msra.mxu0 %v969
    %1499 = vmatprep.subr.bf16.mxu0 %v966
    %1500 = vmatpush2.bf16.msra.mxu0 %v965
    %1501 = vmatprep.subr.bf16.mxu0 %v962
    %1502 = vmatpush2.bf16.msra.mxu0 %v961
    %1503 = vmatprep.subr.bf16.mxu0 %v958
    %1504 = vmatpush2.bf16.msra.mxu0 %v957
    %1505 = vmatprep.subr.bf16.mxu0 %v954
    %1506 = vmatpush2.bf16.msra.mxu0 %v953
    %1507 = vmatprep.subr.bf16.mxu0 %v950
    %1508 = vmatpush2.bf16.msra.mxu0 %v949
    %1509 = vmatprep.subr.bf16.mxu0 %v946
    %1510 = vmatpush2.bf16.msra.mxu0 %v945
    %1511 = vmatprep.mubr.bf16.mxu0 %v99
    %1512 = vmatmul.mubr.bf16.gmra.mxu0 %v98
    %v1513 = vpop.f32.mrf.mxu0
    %v1514 = vadd.f32 %v314, %v1513
    %v1515 = vpop.f32.mrf.mxu0
    %v1516 = vadd.f32 %v318, %v1515
    %v1517 = vpop.f32.mrf.mxu0
    %v1518 = vadd.f32 %v314, %v1517
    %v1519 = vpop.f32.mrf.mxu0
    %v1520 = vadd.f32 %v318, %v1519
    %1521 = vdwg.mxu0
    %1522 = vmatprep.subr.bf16.mxu0 %v1006
    %1523 = vmatpush1.bf16.msra.mxu0 %v1005
    %1524 = vmatprep.subr.bf16.mxu0 %v1002
    %1525 = vmatpush1.bf16.msra.mxu0 %v1001
    %1526 = vmatprep.subr.bf16.mxu0 %v998
    %1527 = vmatpush1.bf16.msra.mxu0 %v997
    %1528 = vmatprep.subr.bf16.mxu0 %v994
    %1529 = vmatpush1.bf16.msra.mxu0 %v993
    %1530 = vmatprep.subr.bf16.mxu0 %v990
    %1531 = vmatpush1.bf16.msra.mxu0 %v989
    %1532 = vmatprep.subr.bf16.mxu0 %v986
    %1533 = vmatpush1.bf16.msra.mxu0 %v985
    %1534 = vmatprep.subr.bf16.mxu0 %v982
    %1535 = vmatpush1.bf16.msra.mxu0 %v981
    %1536 = vmatprep.subr.bf16.mxu0 %v978
    %1537 = vmatpush1.bf16.msra.mxu0 %v977
    %1538 = vmatprep.subr.bf16.mxu0 %v1038
    %1539 = vmatpush2.bf16.msra.mxu0 %v1037
    %1540 = vmatprep.subr.bf16.mxu0 %v1034
    %1541 = vmatpush2.bf16.msra.mxu0 %v1033
    %1542 = vmatprep.subr.bf16.mxu0 %v1030
    %1543 = vmatpush2.bf16.msra.mxu0 %v1029
    %1544 = vmatprep.subr.bf16.mxu0 %v1026
    %1545 = vmatpush2.bf16.msra.mxu0 %v1025
    %1546 = vmatprep.subr.bf16.mxu0 %v1022
    %1547 = vmatpush2.bf16.msra.mxu0 %v1021
    %1548 = vmatprep.subr.bf16.mxu0 %v1018
    %1549 = vmatpush2.bf16.msra.mxu0 %v1017
    %1550 = vmatprep.subr.bf16.mxu0 %v1014
    %1551 = vmatpush2.bf16.msra.mxu0 %v1013
    %1552 = vmatprep.subr.bf16.mxu0 %v1010
    %1553 = vmatpush2.bf16.msra.mxu0 %v1009
    %1554 = vmatprep.mubr.bf16.mxu0 %v101
    %1555 = vmatmul.mubr.bf16.gmra.mxu0 %v100
    %v1556 = vpop.f32.mrf.mxu0
    %v1557 = vadd.f32 %v1514, %v1556
    %v1558 = vpop.f32.mrf.mxu0
    %v1559 = vadd.f32 %v1516, %v1558
    %v1560 = vpop.f32.mrf.mxu0
    %v1561 = vadd.f32 %v1518, %v1560
    %v1562 = vpop.f32.mrf.mxu0
    %v1563 = vadd.f32 %v1520, %v1562
    %1564 = vdwg.mxu0
    %1565 = vmatprep.subr.bf16.mxu0 %v1070
    %1566 = vmatpush1.bf16.msra.mxu0 %v1069
    %1567 = vmatprep.subr.bf16.mxu0 %v1066
    %1568 = vmatpush1.bf16.msra.mxu0 %v1065
    %1569 = vmatprep.subr.bf16.mxu0 %v1062
    %1570 = vmatpush1.bf16.msra.mxu0 %v1061
    %1571 = vmatprep.subr.bf16.mxu0 %v1058
    %1572 = vmatpush1.bf16.msra.mxu0 %v1057
    %1573 = vmatprep.subr.bf16.mxu0 %v1054
    %1574 = vmatpush1.bf16.msra.mxu0 %v1053
    %1575 = vmatprep.subr.bf16.mxu0 %v1050
    %1576 = vmatpush1.bf16.msra.mxu0 %v1049
    %1577 = vmatprep.subr.bf16.mxu0 %v1046
    %1578 = vmatpush1.bf16.msra.mxu0 %v1045
    %1579 = vmatprep.subr.bf16.mxu0 %v1042
    %1580 = vmatpush1.bf16.msra.mxu0 %v1041
    %1581 = vmatprep.subr.bf16.mxu0 %v1102
    %1582 = vmatpush2.bf16.msra.mxu0 %v1101
    %1583 = vmatprep.subr.bf16.mxu0 %v1098
    %1584 = vmatpush2.bf16.msra.mxu0 %v1097
    %1585 = vmatprep.subr.bf16.mxu0 %v1094
    %1586 = vmatpush2.bf16.msra.mxu0 %v1093
    %1587 = vmatprep.subr.bf16.mxu0 %v1090
    %1588 = vmatpush2.bf16.msra.mxu0 %v1089
    %1589 = vmatprep.subr.bf16.mxu0 %v1086
    %1590 = vmatpush2.bf16.msra.mxu0 %v1085
    %1591 = vmatprep.subr.bf16.mxu0 %v1082
    %1592 = vmatpush2.bf16.msra.mxu0 %v1081
    %1593 = vmatprep.subr.bf16.mxu0 %v1078
    %1594 = vmatpush2.bf16.msra.mxu0 %v1077
    %1595 = vmatprep.subr.bf16.mxu0 %v1074
    %1596 = vmatpush2.bf16.msra.mxu0 %v1073
    %1597 = vmatprep.mubr.bf16.mxu0 %v103
    %1598 = vmatmul.mubr.bf16.gmra.mxu0 %v102
    %v1599 = vpop.f32.mrf.mxu0
    %v1600 = vadd.f32 %v1557, %v1599
    %v1601 = vpop.f32.mrf.mxu0
    %v1602 = vadd.f32 %v1559, %v1601
    %v1603 = vpop.f32.mrf.mxu0
    %v1604 = vadd.f32 %v1561, %v1603
    %v1605 = vpop.f32.mrf.mxu0
    %v1606 = vadd.f32 %v1563, %v1605
    %1607 = vdwg.mxu0
    %1608 = vmatprep.subr.bf16.mxu0 0
    %1609 = vmatpush1.bf16.msra.mxu0 0
    %1610 = vmatprep.subr.bf16.mxu0 0
    %1611 = vmatpush1.bf16.msra.mxu0 0
    %1612 = vmatprep.subr.bf16.mxu0 0
    %1613 = vmatpush1.bf16.msra.mxu0 0
    %1614 = vmatprep.subr.bf16.mxu0 0
    %1615 = vmatpush1.bf16.msra.mxu0 0
    %1616 = vmatprep.subr.bf16.mxu0 0
    %1617 = vmatpush1.bf16.msra.mxu0 0
    %1618 = vmatprep.subr.bf16.mxu0 0
    %1619 = vmatpush1.bf16.msra.mxu0 0
    %1620 = vmatprep.subr.bf16.mxu0 0
    %1621 = vmatpush1.bf16.msra.mxu0 0
    %1622 = vmatprep.subr.bf16.mxu0 %v1106
    %1623 = vmatpush1.bf16.msra.mxu0 %v1105
    %1624 = vmatprep.subr.bf16.mxu0 0
    %1625 = vmatpush2.bf16.msra.mxu0 0
    %1626 = vmatprep.subr.bf16.mxu0 0
    %1627 = vmatpush2.bf16.msra.mxu0 0
    %1628 = vmatprep.subr.bf16.mxu0 0
    %1629 = vmatpush2.bf16.msra.mxu0 0
    %1630 = vmatprep.subr.bf16.mxu0 0
    %1631 = vmatpush2.bf16.msra.mxu0 0
    %1632 = vmatprep.subr.bf16.mxu0 0
    %1633 = vmatpush2.bf16.msra.mxu0 0
    %1634 = vmatprep.subr.bf16.mxu0 0
    %1635 = vmatpush2.bf16.msra.mxu0 0
    %1636 = vmatprep.subr.bf16.mxu0 0
    %1637 = vmatpush2.bf16.msra.mxu0 0
    %1638 = vmatprep.subr.bf16.mxu0 0
    %1639 = vmatpush2.bf16.msra.mxu0 0
    %1640 = vmatprep.mubr.bf16.mxu0 0
    %1641 = vmatmul.mubr.bf16.gmra.mxu0 %v1305
    %v1642 = vpop.f32.mrf.mxu0
    %v1643 = vadd.f32 %v1600, %v1642
    %v1644 = vpop.f32.mrf.mxu0
    %v1645 = vadd.f32 %v1602, %v1644
    %v1646 = vpop.f32.mrf.mxu0
    %v1647 = vadd.f32 %v1604, %v1646
    %v1648 = vpop.f32.mrf.mxu0
    %v1649 = vadd.f32 %v1606, %v1648
    %1650 = vdwg.mxu0
    %v1651 = vmul.f32 %v1471, 0.2
    %v1652 = vmul.f32 %v1473, 0.2
    %v1653 = vmul.f32 %v1643, 0.2
    %v1654 = vmul.f32 %v1645, 0.2
    %v1655 = vmul.f32 %v1475, 0.2
    %v1656 = vmul.f32 %v1477, 0.2
    %v1657 = vmul.f32 %v1647, 0.2
    %v1658 = vmul.f32 %v1649, 0.2
    %v1659 = vmax.f32 %v1471, %v1651
    %v1660 = vmax.f32 %v1473, %v1652
    %v1661 = vmax.f32 %v1643, %v1653
    %v1662 = vmax.f32 %v1645, %v1654
    %v1663 = vmax.f32 %v1475, %v1655
    %v1664 = vmax.f32 %v1477, %v1656
    %v1665 = vmax.f32 %v1647, %v1657
    %v1666 = vmax.f32 %v1649, %v1658
    %v1667 = vpack.c.bf16 %v1663, %v1659
    %v1668 = vpack.c.bf16 %v1664, %v1660
    %v1669 = vpack.c.bf16 %v1665, %v1661
    %v1670 = vpack.c.bf16 %v1666, %v1662
    %v1671 = vld [vmem:[#allocation7] sm:$0xff]
    %v1672 = vld [vmem:[#allocation7 + $0x8] sm:$0xff]
    %v1673 = vld [vmem:[#allocation7 + $0x10] sm:$0xff]
    %v1674 = vld [vmem:[#allocation7 + $0x18] sm:$0xff]
    %v1675 = vld [vmem:[#allocation7 + $0x20] sm:$0xff]
    %v1676 = vld [vmem:[#allocation7 + $0x28] sm:$0xff]
    %v1677 = vld [vmem:[#allocation7 + $0x30] sm:$0xff]
    %v1678 = vld [vmem:[#allocation7 + $0x38] sm:$0xff]
    %v1679 = vld [vmem:[#allocation7 + $0x40] sm:$0xff]
    %v1680 = vld [vmem:[#allocation7 + $0x48] sm:$0xff]
    %v1681 = vld [vmem:[#allocation7 + $0x50] sm:$0xff]
    %v1682 = vld [vmem:[#allocation7 + $0x58] sm:$0xff]
    %v1683 = vld [vmem:[#allocation7 + $0x60] sm:$0xff]
    %v1684 = vld [vmem:[#allocation7 + $0x68] sm:$0xff]
    %v1685 = vld [vmem:[#allocation7 + $0x70] sm:$0xff]
    %v1686 = vld [vmem:[#allocation7 + $0x78] sm:$0xff]
    %v1687 = vld [vmem:[#allocation7 + $0x80] sm:$0xff]
    %v1688 = vld [vmem:[#allocation7 + $0x88] sm:$0xff]
    %v1689 = vld [vmem:[#allocation7 + $0x90] sm:$0xff]
    %v1690 = vld [vmem:[#allocation7 + $0x98] sm:$0xff]
    %v1691 = vld [vmem:[#allocation7 + $0xa0] sm:$0xff]
    %v1692 = vld [vmem:[#allocation7 + $0xa8] sm:$0xff]
    %v1693 = vld [vmem:[#allocation7 + $0xb0] sm:$0xff]
    %v1694 = vld [vmem:[#allocation7 + $0xb8] sm:$0xff]
    %v1695 = vld [vmem:[#allocation7 + $0xc0] sm:$0xff]
    %v1696 = vld [vmem:[#allocation7 + $0xc8] sm:$0xff]
    %v1697 = vld [vmem:[#allocation7 + $0xd0] sm:$0xff]
    %v1698 = vld [vmem:[#allocation7 + $0xd8] sm:$0xff]
    %v1699 = vld [vmem:[#allocation7 + $0xe0] sm:$0xff]
    %v1700 = vld [vmem:[#allocation7 + $0xe8] sm:$0xff]
    %v1701 = vld [vmem:[#allocation7 + $0xf0] sm:$0xff]
    %v1702 = vld [vmem:[#allocation7 + $0xf8] sm:$0xff]
    %v1703 = vld [vmem:[#allocation7 + $0x100] sm:$0xff]
    %v1704 = vld [vmem:[#allocation7 + $0x108] sm:$0xff]
    %v1705 = vld [vmem:[#allocation7 + $0x110] sm:$0xff]
    %v1706 = vld [vmem:[#allocation7 + $0x118] sm:$0xff]
    %v1707 = vld [vmem:[#allocation7 + $0x120] sm:$0xff]
    %v1708 = vld [vmem:[#allocation7 + $0x128] sm:$0xff]
    %v1709 = vld [vmem:[#allocation7 + $0x130] sm:$0xff]
    %v1710 = vld [vmem:[#allocation7 + $0x138] sm:$0xff]
    %v1711 = vld [vmem:[#allocation7 + $0x140] sm:$0xff]
    %v1712 = vld [vmem:[#allocation7 + $0x148] sm:$0xff]
    %v1713 = vld [vmem:[#allocation7 + $0x150] sm:$0xff]
    %v1714 = vld [vmem:[#allocation7 + $0x158] sm:$0xff]
    %v1715 = vld [vmem:[#allocation7 + $0x160] sm:$0xff]
    %v1716 = vld [vmem:[#allocation7 + $0x168] sm:$0xff]
    %v1717 = vld [vmem:[#allocation7 + $0x170] sm:$0xff]
    %v1718 = vld [vmem:[#allocation7 + $0x178] sm:$0xff]
    %v1719 = vld [vmem:[#allocation7 + $0x180] sm:$0xff]
    %v1720 = vld [vmem:[#allocation7 + $0x188] sm:$0xff]
    %v1721 = vld [vmem:[#allocation7 + $0x190] sm:$0xff]
    %v1722 = vld [vmem:[#allocation7 + $0x198] sm:$0xff]
    %v1723 = vld [vmem:[#allocation7 + $0x1a0] sm:$0xff]
    %v1724 = vld [vmem:[#allocation7 + $0x1a8] sm:$0xff]
    %v1725 = vld [vmem:[#allocation7 + $0x1b0] sm:$0xff]
    %v1726 = vld [vmem:[#allocation7 + $0x1b8] sm:$0xff]
    %v1727 = vld [vmem:[#allocation7 + $0x1c0] sm:$0xff]
    %v1728 = vld [vmem:[#allocation7 + $0x1c8] sm:$0xff]
    %v1729 = vld [vmem:[#allocation7 + $0x1d0] sm:$0xff]
    %v1730 = vld [vmem:[#allocation7 + $0x1d8] sm:$0xff]
    %v1731 = vld [vmem:[#allocation7 + $0x1e0] sm:$0xff]
    %v1732 = vld [vmem:[#allocation7 + $0x1e8] sm:$0xff]
    %v1733 = vld [vmem:[#allocation7 + $0x1f0] sm:$0xff]
    %v1734 = vld [vmem:[#allocation7 + $0x1f8] sm:$0xff]
    %v1735 = vld [vmem:[%s4] sm:$0x3]
    %v1737 = vlaneseq
    %v1738 = vshrl.u32 %v1737, 7
    %v1739 = vsub.s32 0, %v1738
    %v1740 = vrot.slane %v1735, %v1739
    %v1741 = vlaneseq
    %v1742 = vshrl.u32 %v1741, 7
    %v1743 = vsub.s32 1, %v1742
    %v1744 = vrot.slane %v1735, %v1743
    %v1811 = vunpack.c.l.b16 %v1671
    %v1812 = vunpack.c.h.b16 %v1671
    %v1813 = vunpack.c.l.b16 %v1672
    %v1814 = vunpack.c.h.b16 %v1672
    %v1815 = vunpack.c.l.b16 %v1673
    %v1816 = vunpack.c.h.b16 %v1673
    %v1817 = vunpack.c.l.b16 %v1674
    %v1818 = vunpack.c.h.b16 %v1674
    %v1819 = vunpack.c.l.b16 %v1675
    %v1820 = vunpack.c.h.b16 %v1675
    %v1821 = vunpack.c.l.b16 %v1676
    %v1822 = vunpack.c.h.b16 %v1676
    %v1823 = vunpack.c.l.b16 %v1677
    %v1824 = vunpack.c.h.b16 %v1677
    %v1825 = vunpack.c.l.b16 %v1678
    %v1826 = vunpack.c.h.b16 %v1678
    %v1827 = vunpack.c.l.b16 %v1679
    %v1828 = vunpack.c.h.b16 %v1679
    %v1829 = vunpack.c.l.b16 %v1680
    %v1830 = vunpack.c.h.b16 %v1680
    %v1831 = vunpack.c.l.b16 %v1681
    %v1832 = vunpack.c.h.b16 %v1681
    %v1833 = vunpack.c.l.b16 %v1682
    %v1834 = vunpack.c.h.b16 %v1682
    %v1835 = vunpack.c.l.b16 %v1683
    %v1836 = vunpack.c.h.b16 %v1683
    %v1837 = vunpack.c.l.b16 %v1684
    %v1838 = vunpack.c.h.b16 %v1684
    %v1839 = vunpack.c.l.b16 %v1685
    %v1840 = vunpack.c.h.b16 %v1685
    %v1841 = vunpack.c.l.b16 %v1686
    %v1842 = vunpack.c.h.b16 %v1686
    %v1843 = vunpack.c.l.b16 %v1687
    %v1844 = vunpack.c.h.b16 %v1687
    %v1845 = vunpack.c.l.b16 %v1688
    %v1846 = vunpack.c.h.b16 %v1688
    %v1847 = vunpack.c.l.b16 %v1689
    %v1848 = vunpack.c.h.b16 %v1689
    %v1849 = vunpack.c.l.b16 %v1690
    %v1850 = vunpack.c.h.b16 %v1690
    %v1851 = vunpack.c.l.b16 %v1691
    %v1852 = vunpack.c.h.b16 %v1691
    %v1853 = vunpack.c.l.b16 %v1692
    %v1854 = vunpack.c.h.b16 %v1692
    %v1855 = vunpack.c.l.b16 %v1693
    %v1856 = vunpack.c.h.b16 %v1693
    %v1857 = vunpack.c.l.b16 %v1694
    %v1858 = vunpack.c.h.b16 %v1694
    %v1859 = vunpack.c.l.b16 %v1695
    %v1860 = vunpack.c.h.b16 %v1695
    %v1861 = vunpack.c.l.b16 %v1696
    %v1862 = vunpack.c.h.b16 %v1696
    %v1863 = vunpack.c.l.b16 %v1697
    %v1864 = vunpack.c.h.b16 %v1697
    %v1865 = vunpack.c.l.b16 %v1698
    %v1866 = vunpack.c.h.b16 %v1698
    %v1867 = vunpack.c.l.b16 %v1699
    %v1868 = vunpack.c.h.b16 %v1699
    %v1869 = vunpack.c.l.b16 %v1700
    %v1870 = vunpack.c.h.b16 %v1700
    %v1871 = vunpack.c.l.b16 %v1701
    %v1872 = vunpack.c.h.b16 %v1701
    %v1873 = vunpack.c.l.b16 %v1702
    %v1874 = vunpack.c.h.b16 %v1702
    %v1875 = vunpack.c.l.b16 %v1703
    %v1876 = vunpack.c.h.b16 %v1703
    %v1877 = vunpack.c.l.b16 %v1704
    %v1878 = vunpack.c.h.b16 %v1704
    %v1879 = vunpack.c.l.b16 %v1705
    %v1880 = vunpack.c.h.b16 %v1705
    %v1881 = vunpack.c.l.b16 %v1706
    %v1882 = vunpack.c.h.b16 %v1706
    %v1883 = vunpack.c.l.b16 %v1707
    %v1884 = vunpack.c.h.b16 %v1707
    %v1885 = vunpack.c.l.b16 %v1708
    %v1886 = vunpack.c.h.b16 %v1708
    %v1887 = vunpack.c.l.b16 %v1709
    %v1888 = vunpack.c.h.b16 %v1709
    %v1889 = vunpack.c.l.b16 %v1710
    %v1890 = vunpack.c.h.b16 %v1710
    %v1891 = vunpack.c.l.b16 %v1711
    %v1892 = vunpack.c.h.b16 %v1711
    %v1893 = vunpack.c.l.b16 %v1712
    %v1894 = vunpack.c.h.b16 %v1712
    %v1895 = vunpack.c.l.b16 %v1713
    %v1896 = vunpack.c.h.b16 %v1713
    %v1897 = vunpack.c.l.b16 %v1714
    %v1898 = vunpack.c.h.b16 %v1714
    %v1899 = vunpack.c.l.b16 %v1715
    %v1900 = vunpack.c.h.b16 %v1715
    %v1901 = vunpack.c.l.b16 %v1716
    %v1902 = vunpack.c.h.b16 %v1716
    %v1903 = vunpack.c.l.b16 %v1717
    %v1904 = vunpack.c.h.b16 %v1717
    %v1905 = vunpack.c.l.b16 %v1718
    %v1906 = vunpack.c.h.b16 %v1718
    %v1907 = vunpack.c.l.b16 %v1719
    %v1908 = vunpack.c.h.b16 %v1719
    %v1909 = vunpack.c.l.b16 %v1720
    %v1910 = vunpack.c.h.b16 %v1720
    %v1911 = vunpack.c.l.b16 %v1721
    %v1912 = vunpack.c.h.b16 %v1721
    %v1913 = vunpack.c.l.b16 %v1722
    %v1914 = vunpack.c.h.b16 %v1722
    %v1915 = vunpack.c.l.b16 %v1723
    %v1916 = vunpack.c.h.b16 %v1723
    %v1917 = vunpack.c.l.b16 %v1724
    %v1918 = vunpack.c.h.b16 %v1724
    %v1919 = vunpack.c.l.b16 %v1725
    %v1920 = vunpack.c.h.b16 %v1725
    %v1921 = vunpack.c.l.b16 %v1726
    %v1922 = vunpack.c.h.b16 %v1726
    %v1923 = vunpack.c.l.b16 %v1727
    %v1924 = vunpack.c.h.b16 %v1727
    %v1925 = vunpack.c.l.b16 %v1728
    %v1926 = vunpack.c.h.b16 %v1728
    %v1927 = vunpack.c.l.b16 %v1729
    %v1928 = vunpack.c.h.b16 %v1729
    %v1929 = vunpack.c.l.b16 %v1730
    %v1930 = vunpack.c.h.b16 %v1730
    %v1931 = vunpack.c.l.b16 %v1731
    %v1932 = vunpack.c.h.b16 %v1731
    %v1933 = vunpack.c.l.b16 %v1732
    %v1934 = vunpack.c.h.b16 %v1732
    %v1935 = vunpack.c.l.b16 %v1733
    %v1936 = vunpack.c.h.b16 %v1733
    %v1937 = vunpack.c.l.b16 %v1734
    %v1938 = vunpack.c.h.b16 %v1734
    %v1939 = vpack.c.b16 %v1813, %v1811
    %v1940 = vpack.c.b16 %v1814, %v1812
    %v1941 = vpack.c.b16 %v1817, %v1815
    %v1942 = vpack.c.b16 %v1818, %v1816
    %v1943 = vpack.c.b16 %v1821, %v1819
    %v1944 = vpack.c.b16 %v1822, %v1820
    %v1945 = vpack.c.b16 %v1825, %v1823
    %v1946 = vpack.c.b16 %v1826, %v1824
    %v1947 = vpack.c.b16 %v1829, %v1827
    %v1948 = vpack.c.b16 %v1830, %v1828
    %v1949 = vpack.c.b16 %v1833, %v1831
    %v1950 = vpack.c.b16 %v1834, %v1832
    %v1951 = vpack.c.b16 %v1837, %v1835
    %v1952 = vpack.c.b16 %v1838, %v1836
    %v1953 = vpack.c.b16 %v1841, %v1839
    %v1954 = vpack.c.b16 %v1842, %v1840
    %v1955 = vpack.c.b16 %v1845, %v1843
    %v1956 = vpack.c.b16 %v1846, %v1844
    %v1957 = vpack.c.b16 %v1849, %v1847
    %v1958 = vpack.c.b16 %v1850, %v1848
    %v1959 = vpack.c.b16 %v1853, %v1851
    %v1960 = vpack.c.b16 %v1854, %v1852
    %v1961 = vpack.c.b16 %v1857, %v1855
    %v1962 = vpack.c.b16 %v1858, %v1856
    %v1963 = vpack.c.b16 %v1861, %v1859
    %v1964 = vpack.c.b16 %v1862, %v1860
    %v1965 = vpack.c.b16 %v1865, %v1863
    %v1966 = vpack.c.b16 %v1866, %v1864
    %v1967 = vpack.c.b16 %v1869, %v1867
    %v1968 = vpack.c.b16 %v1870, %v1868
    %v1969 = vpack.c.b16 %v1873, %v1871
    %v1970 = vpack.c.b16 %v1874, %v1872
    %v1971 = vpack.c.b16 %v1877, %v1875
    %v1972 = vpack.c.b16 %v1878, %v1876
    %v1973 = vpack.c.b16 %v1881, %v1879
    %v1974 = vpack.c.b16 %v1882, %v1880
    %v1975 = vpack.c.b16 %v1885, %v1883
    %v1976 = vpack.c.b16 %v1886, %v1884
    %v1977 = vpack.c.b16 %v1889, %v1887
    %v1978 = vpack.c.b16 %v1890, %v1888
    %v1979 = vpack.c.b16 %v1893, %v1891
    %v1980 = vpack.c.b16 %v1894, %v1892
    %v1981 = vpack.c.b16 %v1897, %v1895
    %v1982 = vpack.c.b16 %v1898, %v1896
    %v1983 = vpack.c.b16 %v1901, %v1899
    %v1984 = vpack.c.b16 %v1902, %v1900
    %v1985 = vpack.c.b16 %v1905, %v1903
    %v1986 = vpack.c.b16 %v1906, %v1904
    %v1987 = vpack.c.b16 %v1909, %v1907
    %v1988 = vpack.c.b16 %v1910, %v1908
    %v1989 = vpack.c.b16 %v1913, %v1911
    %v1990 = vpack.c.b16 %v1914, %v1912
    %v1991 = vpack.c.b16 %v1917, %v1915
    %v1992 = vpack.c.b16 %v1918, %v1916
    %v1993 = vpack.c.b16 %v1921, %v1919
    %v1994 = vpack.c.b16 %v1922, %v1920
    %v1995 = vpack.c.b16 %v1925, %v1923
    %v1996 = vpack.c.b16 %v1926, %v1924
    %v1997 = vpack.c.b16 %v1929, %v1927
    %v1998 = vpack.c.b16 %v1930, %v1928
    %v1999 = vpack.c.b16 %v1933, %v1931
    %v2000 = vpack.c.b16 %v1934, %v1932
    %v2001 = vpack.c.b16 %v1937, %v1935
    %v2002 = vpack.c.b16 %v1938, %v1936
    %2067 = vmatprep.subr.bf16.mxu0 %v1954
    %2068 = vmatpush1.bf16.msra.mxu0 %v1953
    %2069 = vmatprep.subr.bf16.mxu0 %v1952
    %2070 = vmatpush1.bf16.msra.mxu0 %v1951
    %2071 = vmatprep.subr.bf16.mxu0 %v1950
    %2072 = vmatpush1.bf16.msra.mxu0 %v1949
    %2073 = vmatprep.subr.bf16.mxu0 %v1948
    %2074 = vmatpush1.bf16.msra.mxu0 %v1947
    %2075 = vmatprep.subr.bf16.mxu0 %v1946
    %2076 = vmatpush1.bf16.msra.mxu0 %v1945
    %2077 = vmatprep.subr.bf16.mxu0 %v1944
    %2078 = vmatpush1.bf16.msra.mxu0 %v1943
    %2079 = vmatprep.subr.bf16.mxu0 %v1942
    %2080 = vmatpush1.bf16.msra.mxu0 %v1941
    %2081 = vmatprep.subr.bf16.mxu0 %v1940
    %2082 = vmatpush1.bf16.msra.mxu0 %v1939
    %2083 = vmatprep.subr.bf16.mxu0 %v1970
    %2084 = vmatpush2.bf16.msra.mxu0 %v1969
    %2085 = vmatprep.subr.bf16.mxu0 %v1968
    %2086 = vmatpush2.bf16.msra.mxu0 %v1967
    %2087 = vmatprep.subr.bf16.mxu0 %v1966
    %2088 = vmatpush2.bf16.msra.mxu0 %v1965
    %2089 = vmatprep.subr.bf16.mxu0 %v1964
    %2090 = vmatpush2.bf16.msra.mxu0 %v1963
    %2091 = vmatprep.subr.bf16.mxu0 %v1962
    %2092 = vmatpush2.bf16.msra.mxu0 %v1961
    %2093 = vmatprep.subr.bf16.mxu0 %v1960
    %2094 = vmatpush2.bf16.msra.mxu0 %v1959
    %2095 = vmatprep.subr.bf16.mxu0 %v1958
    %2096 = vmatpush2.bf16.msra.mxu0 %v1957
    %2097 = vmatprep.subr.bf16.mxu0 %v1956
    %2098 = vmatpush2.bf16.msra.mxu0 %v1955
    %2099 = vmatprep.mubr.bf16.mxu0 %v1668
    %2100 = vmatmul.mubr.bf16.gmra.mxu0 %v1667
    %v2101 = vpop.f32.mrf.mxu0
    %v2102 = vadd.f32 %v1740, %v2101
    %v2103 = vpop.f32.mrf.mxu0
    %v2104 = vadd.f32 %v1744, %v2103
    %v2105 = vpop.f32.mrf.mxu0
    %v2106 = vadd.f32 %v1740, %v2105
    %v2107 = vpop.f32.mrf.mxu0
    %v2108 = vadd.f32 %v1744, %v2107
    %2109 = vdwg.mxu0
    %2110 = vmatprep.subr.bf16.mxu0 %v1986
    %2111 = vmatpush1.bf16.msra.mxu0 %v1985
    %2112 = vmatprep.subr.bf16.mxu0 %v1984
    %2113 = vmatpush1.bf16.msra.mxu0 %v1983
    %2114 = vmatprep.subr.bf16.mxu0 %v1982
    %2115 = vmatpush1.bf16.msra.mxu0 %v1981
    %2116 = vmatprep.subr.bf16.mxu0 %v1980
    %2117 = vmatpush1.bf16.msra.mxu0 %v1979
    %2118 = vmatprep.subr.bf16.mxu0 %v1978
    %2119 = vmatpush1.bf16.msra.mxu0 %v1977
    %2120 = vmatprep.subr.bf16.mxu0 %v1976
    %2121 = vmatpush1.bf16.msra.mxu0 %v1975
    %2122 = vmatprep.subr.bf16.mxu0 %v1974
    %2123 = vmatpush1.bf16.msra.mxu0 %v1973
    %2124 = vmatprep.subr.bf16.mxu0 %v1972
    %2125 = vmatpush1.bf16.msra.mxu0 %v1971
    %2126 = vmatprep.subr.bf16.mxu0 %v2002
    %2127 = vmatpush2.bf16.msra.mxu0 %v2001
    %2128 = vmatprep.subr.bf16.mxu0 %v2000
    %2129 = vmatpush2.bf16.msra.mxu0 %v1999
    %2130 = vmatprep.subr.bf16.mxu0 %v1998
    %2131 = vmatpush2.bf16.msra.mxu0 %v1997
    %2132 = vmatprep.subr.bf16.mxu0 %v1996
    %2133 = vmatpush2.bf16.msra.mxu0 %v1995
    %2134 = vmatprep.subr.bf16.mxu0 %v1994
    %2135 = vmatpush2.bf16.msra.mxu0 %v1993
    %2136 = vmatprep.subr.bf16.mxu0 %v1992
    %2137 = vmatpush2.bf16.msra.mxu0 %v1991
    %2138 = vmatprep.subr.bf16.mxu0 %v1990
    %2139 = vmatpush2.bf16.msra.mxu0 %v1989
    %2140 = vmatprep.subr.bf16.mxu0 %v1988
    %2141 = vmatpush2.bf16.msra.mxu0 %v1987
    %2142 = vmatprep.mubr.bf16.mxu0 %v1670
    %2143 = vmatmul.mubr.bf16.gmra.mxu0 %v1669
    %v2144 = vpop.f32.mrf.mxu0
    %v2145 = vadd.f32 %v2102, %v2144
    %v2146 = vpop.f32.mrf.mxu0
    %v2147 = vadd.f32 %v2104, %v2146
    %v2148 = vpop.f32.mrf.mxu0
    %v2149 = vadd.f32 %v2106, %v2148
    %v2150 = vpop.f32.mrf.mxu0
    %v2151 = vadd.f32 %v2108, %v2150
    %2152 = vdwg.mxu0
    %v2153 = vmul.f32 %v2145, 0.2
    %v2154 = vmul.f32 %v2147, 0.2
    %v2155 = vmul.f32 %v2149, 0.2
    %v2156 = vmul.f32 %v2151, 0.2
    %v2157 = vmax.f32 %v2145, %v2153
    %v2158 = vmax.f32 %v2147, %v2154
    %v2159 = vmax.f32 %v2149, %v2155
    %v2160 = vmax.f32 %v2151, %v2156
    %v2161 = vpack.c.bf16 %v2159, %v2157
    %v2162 = vpack.c.bf16 %v2160, %v2158
    %v2163 = vld [vmem:[#allocation8] sm:$0xf]
    %v2164 = vld [vmem:[#allocation8 + $0x4] sm:$0xf]
    %v2165 = vld [vmem:[#allocation8 + $0x8] sm:$0xf]
    %v2166 = vld [vmem:[#allocation8 + $0xc] sm:$0xf]
    %v2167 = vld [vmem:[#allocation8 + $0x10] sm:$0xf]
    %v2168 = vld [vmem:[#allocation8 + $0x14] sm:$0xf]
    %v2169 = vld [vmem:[#allocation8 + $0x18] sm:$0xf]
    %v2170 = vld [vmem:[#allocation8 + $0x1c] sm:$0xf]
    %v2171 = vld [vmem:[#allocation8 + $0x20] sm:$0xf]
    %v2172 = vld [vmem:[#allocation8 + $0x24] sm:$0xf]
    %v2173 = vld [vmem:[#allocation8 + $0x28] sm:$0xf]
    %v2174 = vld [vmem:[#allocation8 + $0x2c] sm:$0xf]
    %v2175 = vld [vmem:[#allocation8 + $0x30] sm:$0xf]
    %v2176 = vld [vmem:[#allocation8 + $0x34] sm:$0xf]
    %v2177 = vld [vmem:[#allocation8 + $0x38] sm:$0xf]
    %v2178 = vld [vmem:[#allocation8 + $0x3c] sm:$0xf]
    %v2179 = vld [vmem:[#allocation8 + $0x40] sm:$0xf]
    %v2180 = vld [vmem:[#allocation8 + $0x44] sm:$0xf]
    %v2181 = vld [vmem:[#allocation8 + $0x48] sm:$0xf]
    %v2182 = vld [vmem:[#allocation8 + $0x4c] sm:$0xf]
    %v2183 = vld [vmem:[#allocation8 + $0x50] sm:$0xf]
    %v2184 = vld [vmem:[#allocation8 + $0x54] sm:$0xf]
    %v2185 = vld [vmem:[#allocation8 + $0x58] sm:$0xf]
    %v2186 = vld [vmem:[#allocation8 + $0x5c] sm:$0xf]
    %v2187 = vld [vmem:[#allocation8 + $0x60] sm:$0xf]
    %v2188 = vld [vmem:[#allocation8 + $0x64] sm:$0xf]
    %v2189 = vld [vmem:[#allocation8 + $0x68] sm:$0xf]
    %v2190 = vld [vmem:[#allocation8 + $0x6c] sm:$0xf]
    %v2191 = vld [vmem:[#allocation8 + $0x70] sm:$0xf]
    %v2192 = vld [vmem:[#allocation8 + $0x74] sm:$0xf]
    %v2193 = vld [vmem:[#allocation8 + $0x78] sm:$0xf]
    %v2194 = vld [vmem:[#allocation8 + $0x7c] sm:$0xf]
    %v2227 = vunpack.c.l.b16 %v2163
    %v2228 = vunpack.c.l.b16 %v2164
    %v2229 = vunpack.c.l.b16 %v2165
    %v2230 = vunpack.c.l.b16 %v2166
    %v2231 = vunpack.c.l.b16 %v2167
    %v2232 = vunpack.c.l.b16 %v2168
    %v2233 = vunpack.c.l.b16 %v2169
    %v2234 = vunpack.c.l.b16 %v2170
    %v2235 = vunpack.c.l.b16 %v2171
    %v2236 = vunpack.c.l.b16 %v2172
    %v2237 = vunpack.c.l.b16 %v2173
    %v2238 = vunpack.c.l.b16 %v2174
    %v2239 = vunpack.c.l.b16 %v2175
    %v2240 = vunpack.c.l.b16 %v2176
    %v2241 = vunpack.c.l.b16 %v2177
    %v2242 = vunpack.c.l.b16 %v2178
    %v2243 = vunpack.c.l.b16 %v2179
    %v2244 = vunpack.c.l.b16 %v2180
    %v2245 = vunpack.c.l.b16 %v2181
    %v2246 = vunpack.c.l.b16 %v2182
    %v2247 = vunpack.c.l.b16 %v2183
    %v2248 = vunpack.c.l.b16 %v2184
    %v2249 = vunpack.c.l.b16 %v2185
    %v2250 = vunpack.c.l.b16 %v2186
    %v2251 = vunpack.c.l.b16 %v2187
    %v2252 = vunpack.c.l.b16 %v2188
    %v2253 = vunpack.c.l.b16 %v2189
    %v2254 = vunpack.c.l.b16 %v2190
    %v2255 = vunpack.c.l.b16 %v2191
    %v2256 = vunpack.c.l.b16 %v2192
    %v2257 = vunpack.c.l.b16 %v2193
    %v2258 = vunpack.c.l.b16 %v2194
    %v2259 = vpack.c.b16 %v2228, %v2227
    %v2260 = vpack.c.b16 %v2230, %v2229
    %v2261 = vpack.c.b16 %v2232, %v2231
    %v2262 = vpack.c.b16 %v2234, %v2233
    %v2263 = vpack.c.b16 %v2236, %v2235
    %v2264 = vpack.c.b16 %v2238, %v2237
    %v2265 = vpack.c.b16 %v2240, %v2239
    %v2266 = vpack.c.b16 %v2242, %v2241
    %v2267 = vpack.c.b16 %v2244, %v2243
    %v2268 = vpack.c.b16 %v2246, %v2245
    %v2269 = vpack.c.b16 %v2248, %v2247
    %v2270 = vpack.c.b16 %v2250, %v2249
    %v2271 = vpack.c.b16 %v2252, %v2251
    %v2272 = vpack.c.b16 %v2254, %v2253
    %v2273 = vpack.c.b16 %v2256, %v2255
    %v2274 = vpack.c.b16 %v2258, %v2257
    %2291 = vmatprep.subr.bf16.mxu0 0
    %2292 = vmatpush1.bf16.msra.mxu0 %v2266
    %2293 = vmatprep.subr.bf16.mxu0 0
    %2294 = vmatpush1.bf16.msra.mxu0 %v2265
    %2295 = vmatprep.subr.bf16.mxu0 0
    %2296 = vmatpush1.bf16.msra.mxu0 %v2264
    %2297 = vmatprep.subr.bf16.mxu0 0
    %2298 = vmatpush1.bf16.msra.mxu0 %v2263
    %2299 = vmatprep.subr.bf16.mxu0 0
    %2300 = vmatpush1.bf16.msra.mxu0 %v2262
    %2301 = vmatprep.subr.bf16.mxu0 0
    %2302 = vmatpush1.bf16.msra.mxu0 %v2261
    %2303 = vmatprep.subr.bf16.mxu0 0
    %2304 = vmatpush1.bf16.msra.mxu0 %v2260
    %2305 = vmatprep.subr.bf16.mxu0 0
    %2306 = vmatpush1.bf16.msra.mxu0 %v2259
    %2307 = vmatprep.subr.bf16.mxu0 0
    %2308 = vmatpush2.bf16.msra.mxu0 %v2274
    %2309 = vmatprep.subr.bf16.mxu0 0
    %2310 = vmatpush2.bf16.msra.mxu0 %v2273
    %2311 = vmatprep.subr.bf16.mxu0 0
    %2312 = vmatpush2.bf16.msra.mxu0 %v2272
    %2313 = vmatprep.subr.bf16.mxu0 0
    %2314 = vmatpush2.bf16.msra.mxu0 %v2271
    %2315 = vmatprep.subr.bf16.mxu0 0
    %2316 = vmatpush2.bf16.msra.mxu0 %v2270
    %2317 = vmatprep.subr.bf16.mxu0 0
    %2318 = vmatpush2.bf16.msra.mxu0 %v2269
    %2319 = vmatprep.subr.bf16.mxu0 0
    %2320 = vmatpush2.bf16.msra.mxu0 %v2268
    %2321 = vmatprep.subr.bf16.mxu0 0
    %2322 = vmatpush2.bf16.msra.mxu0 %v2267
    %2323 = vmatprep.mubr.bf16.mxu0 %v2162
    %2324 = vmatmul.mubr.bf16.gmra.mxu0 %v2161
    %v2325 = vpop.f32.mrf.mxu0
    %v2326 = vadd.f32 0.0, %v2325
    %v2327 = vpop.f32.mrf.mxu0
    %v2328 = vpop.f32.mrf.mxu0
    %v2329 = vadd.f32 0.0, %v2328
    %v2330 = vpop.f32.mrf.mxu0
    %2331 = vdwg.mxu0
    %v2332 = vld [vmem:[#allocation2] sm:$0x1]
    %v2334 = vlaneseq
    %v2335 = vshrl.u32 %v2334, 7
    %v2336 = vsub.s32 0, %v2335
    %v2337 = vrot.slane %v2332, %v2336
    %v2339 = vadd.f32 %v2326, %v2337
    %v2340 = vadd.f32 %v2329, %v2337
    %v2341 = vmul.f32 %v2339, 0.5
    %v2342 = vmul.f32 %v2340, 0.5
    %v2343 = vtanh.pop %v2341
    %v2344 = vtanh.pop %v2342
    %v2345 = vadd.f32 %v2343, 1.0
    %v2346 = vadd.f32 %v2344, 1.0
    %v2347 = vmul.f32 %v2345, 0.5
    %v2348 = vmul.f32 %v2346, 0.5
    %vm2349 = vcmask 7168
    %2350 = vst.msk [vmem:[%s7] sm:$0xff] %vm2349, %v2347
    %2351 = vst.msk [vmem:[%s7 + $0x8] sm:$0xff] %vm2349, %v2348
    // Predicated region
    $region46: #{tpu_custom_call.1} parent=1 // pred_check
      _
    $region47: #{tpu_custom_call.1} parent=1 // pred_check_branch
      %2353 = sbr.rel (0) target = $region49
    $region48: #{tpu_custom_call.1} parent=1 // pred_region
      _
    $region49: #{tpu_custom_call.1} parent=1 // pred_fallthru
      _
    // Predicated region
    $region50: #{tpu_custom_call.1} parent=1 // pred_check
      _
    $region51: #{tpu_custom_call.1} parent=1 // pred_check_branch
      %2355 = sbr.rel (0) target = $region53
    $region52: #{tpu_custom_call.1} parent=1 // pred_region
      _
    $region53: #{tpu_custom_call.1} parent=1 // pred_fallthru
      _
    %2356 = vsyncpa [#allocation4], 1
    %2357 = vsyncpa [#allocation6], 1
    %2358 = vsyncpa [#allocation9], 1

</llo_original>
